<compile_context>
chip_gen: v7x
topology: tpu7x:2x2x1
jax: 0.10.0
libtpu: 0.0.40
codegen_flags: <defaults>
</compile_context>

<pallas_src>
import functools

import jax
import jax.numpy as jnp
from jax import lax
from jax.experimental import pallas as pl
from jax.experimental.pallas import tpu as pltpu

EPS = 1e-5


# --------------------------------------------------------------------------- #
# Fused kernel: one image (NHWC tile) per grid step
# --------------------------------------------------------------------------- #
def _basic_block_kernel(x_ref, sb_ref, w1_ref, w2_ref, o_ref, pad_ref, *, H, W, C):
    """Fused pre-activation residual block.

    x_ref:   (1, H, W, C)   input activation tile
    sb_ref:  (4, C)         rows: [scale1, bias1, scale2, bias2] (folded BN affine)
    w1_ref:  (9*C, C)       conv1 weights, (kh, kw, cin) flattened on rows -> cout cols
    w2_ref:  (9*C, C)       conv2 weights
    o_ref:   (1, H, W, C)   output tile
    pad_ref: (H+2, W+2, C)  VMEM scratch: zero-padded conv input (reused by both convs)
    """
    x0 = x_ref[0]                                   # (H, W, C)
    s1 = sb_ref[pl.ds(0, 1), :]                     # (1, C)
    b1 = sb_ref[pl.ds(1, 1), :]
    s2 = sb_ref[pl.ds(2, 1), :]
    b2 = sb_ref[pl.ds(3, 1), :]

    # Zero once; only the interior is rewritten below, so the border stays zero
    # for both convs. (Done every step so it is correct under megacore sharding.)
    pad_ref[...] = jnp.zeros_like(pad_ref)

    def conv3x3(a_hwc, w_ref):
        # In-VMEM zero padding + im2col + a single MXU matmul with K = 9*C.
        pad_ref[pl.ds(1, H), pl.ds(1, W), :] = a_hwc
        cols = [
            pad_ref[pl.ds(kh, H), pl.ds(kw, W), :].reshape(H * W, C)
            for kh in range(3)
            for kw in range(3)
        ]
        patches = jnp.concatenate(cols, axis=-1)    # (H*W, 9*C)
        return jnp.dot(patches, w_ref[...], preferred_element_type=jnp.float32)

    # bn1 + relu1 (folded affine), then conv1
    a1 = jnp.maximum(x0 * s1 + b1, 0.0)             # (H, W, C)
    y1 = conv3x3(a1, w1_ref)                        # (H*W, C) f32

    # bn2 + relu2, then conv2 fused with the residual add.
    # TODO(synk): F.dropout path (dropRate > 0) not implemented; dropRate = 0.0 here.
    a2 = jnp.maximum(y1 * s2 + b2, 0.0)             # (H*W, C)
    y2 = conv3x3(a2.reshape(H, W, C), w2_ref)       # (H*W, C) f32

    # residual: torch.add(x, out) since equalInOut=True.
    # TODO(synk): convShortcut / stride>1 (equalInOut=False) path not exercised here.
    o_ref[0] = (y2.reshape(H, W, C) + x0).astype(o_ref.dtype)


# --------------------------------------------------------------------------- #
# Wrapper: NCHW in / NCHW out (PyTorch layout), one fused pallas_call
# --------------------------------------------------------------------------- #
def basic_block_forward(x_nchw, params):
    N, C, H, W = x_nchw.shape
    x = jnp.transpose(x_nchw, (0, 2, 3, 1))         # NCHW -> NHWC (C on the lane axis)

    # Fold inference BN into per-channel scale/bias.
    s1 = params["gamma1"] * lax.rsqrt(params["var1"] + EPS)
    b1 = params["beta1"] - params["mean1"] * s1
    s2 = params["gamma2"] * lax.rsqrt(params["var2"] + EPS)
    b2 = params["beta2"] - params["mean2"] * s2
    sb = jnp.stack([s1, b1, s2, b2]).astype(jnp.float32)          # (4, C)

    # HWIO -> (9*C, C): rows ordered (kh, kw, cin) to match the im2col column order.
    w1 = params["w1_hwio"].reshape(9 * C, C).astype(jnp.float32)
    w2 = params["w2_hwio"].reshape(9 * C, C).astype(jnp.float32)

    # TODO(synk): for C < 128 flatten (W, C) -> W*C in the wrapper to keep HBM blocks
    # lane-dense; with C a multiple of 128 (as tested) NHWC is already lane-dense.
    kernel = functools.partial(_basic_block_kernel, H=H, W=W, C=C)

    out = pl.pallas_call(
        kernel,
        out_shape=jax.ShapeDtypeStruct((N, H, W, C), x.dtype),
        grid=(N,),
        in_specs=[
            pl.BlockSpec((1, H, W, C), lambda n: (n, 0, 0, 0)),   # activation tile
            pl.BlockSpec((4, C), lambda n: (0, 0)),               # folded BN params
            pl.BlockSpec((9 * C, C), lambda n: (0, 0)),           # conv1 weights
            pl.BlockSpec((9 * C, C), lambda n: (0, 0)),           # conv2 weights
        ],
        out_specs=pl.BlockSpec((1, H, W, C), lambda n: (n, 0, 0, 0)),
        scratch_shapes=[pltpu.VMEM((H + 2, W + 2, C), jnp.float32)],
        compiler_params=pltpu.CompilerParams(
            dimension_semantics=("parallel",),      # v7x: batch split across 2 TCs
        ),
    )(x, sb, w1, w2)

    return jnp.transpose(out, (0, 3, 1, 2))         # NHWC -> NCHW


# --------------------------------------------------------------------------- #
# Pure-JAX reference (correctness check)
# --------------------------------------------------------------------------- #
def reference_forward(x, params):
    def bn(x, g, b, m, v):
        g = g[None, :, None, None]
        b = b[None, :, None, None]
        m = m[None, :, None, None]
        v = v[None, :, None, None]
        return (x - m) / jnp.sqrt(v + EPS) * g + b

    o = jnp.maximum(bn(x, params["gamma1"], params["beta1"],
                       params["mean1"], params["var1"]), 0.0)
    y = lax.conv_general_dilated(o, params["w1_oihw"], (1, 1), "SAME",
                                 dimension_numbers=("NCHW", "OIHW", "NCHW"),
                                 precision=lax.Precision.HIGHEST)
    o = jnp.maximum(bn(y, params["gamma2"], params["beta2"],
                       params["mean2"], params["var2"]), 0.0)
    y = lax.conv_general_dilated(o, params["w2_oihw"], (1, 1), "SAME",
                                 dimension_numbers=("NCHW", "OIHW", "NCHW"),
                                 precision=lax.Precision.HIGHEST)
    return x + y


# --------------------------------------------------------------------------- #
if __name__ == "__main__":
    # in_planes = out_planes = 128 (a real WideResNet-28-8 block width), stride = 1.
    N, C, H, W = 2, 128, 8, 8
    key = jax.random.PRNGKey(0)
    ks = jax.random.split(key, 11)

    x = jax.random.normal(ks[0], (N, C, H, W), jnp.float32)

    w1_oihw = 0.05 * jax.random.normal(ks[1], (C, C, 3, 3), jnp.float32)
    w2_oihw = 0.05 * jax.random.normal(ks[2], (C, C, 3, 3), jnp.float32)

    params = dict(
        gamma1=1.0 + 0.1 * jax.random.normal(ks[3], (C,), jnp.float32),
        beta1=0.1 * jax.random.normal(ks[4], (C,), jnp.float32),
        mean1=0.1 * jax.random.normal(ks[5], (C,), jnp.float32),
        var1=0.5 + jnp.abs(jax.random.normal(ks[6], (C,), jnp.float32)),
        gamma2=1.0 + 0.1 * jax.random.normal(ks[7], (C,), jnp.float32),
        beta2=0.1 * jax.random.normal(ks[8], (C,), jnp.float32),
        mean2=0.1 * jax.random.normal(ks[9], (C,), jnp.float32),
        var2=0.5 + jnp.abs(jax.random.normal(ks[10], (C,), jnp.float32)),
        w1_oihw=w1_oihw,
        w2_oihw=w2_oihw,
        # HWIO layout for the NHWC Pallas kernel
        w1_hwio=jnp.transpose(w1_oihw, (2, 3, 1, 0)),
        w2_hwio=jnp.transpose(w2_oihw, (2, 3, 1, 0)),
    )

    out = jax.jit(basic_block_forward)(x, params)
    out = jax.block_until_ready(out)

    ref = reference_forward(x, params)
    assert out.shape == (N, C, H, W)
    max_err = float(jnp.max(jnp.abs(out - ref)))
    assert bool(jnp.allclose(out, ref, atol=5e-3, rtol=5e-3)), (
        f"mismatch vs reference, max abs err = {max_err}")

    print("KERNEL_OK")
</pallas_src>

<mosaic_0001>
module attributes {stable_mosaic.version = 11 : i64} {
  func.func @_basic_block_kernel(%arg0: i32, %arg1: memref<1x8x8x128xf32, #tpu.memory_space<vmem>>, %arg2: memref<4x128xf32, #tpu.memory_space<vmem>>, %arg3: memref<1152x128xf32, #tpu.memory_space<vmem>>, %arg4: memref<1152x128xf32, #tpu.memory_space<vmem>>, %arg5: memref<1x8x8x128xf32, #tpu.memory_space<vmem>>, %arg6: memref<10x10x128xf32, #tpu.memory_space<vmem>>) attributes {dimension_semantics = [#tpu.dimension_semantics<parallel>], iteration_bounds = array<i64: 2>, scalar_prefetch = 0 : i64, scratch_operands = 1 : i64, tpu.core_type = #tpu.core_type<tc>, window_params = [{transform_indices = @transform_0, window_bounds = array<i64: 1, 8, 8, 128>}, {pipeline_mode = #tpu.pipeline_mode<synchronous>, transform_indices = @transform_1, window_bounds = array<i64: 4, 128>}, {pipeline_mode = #tpu.pipeline_mode<synchronous>, transform_indices = @transform_2, window_bounds = array<i64: 1152, 128>}, {pipeline_mode = #tpu.pipeline_mode<synchronous>, transform_indices = @transform_3, window_bounds = array<i64: 1152, 128>}, {transform_indices = @transform_4, window_bounds = array<i64: 1, 8, 8, 128>}]} {
    %c0 = arith.constant 0 : index
    %c0_0 = arith.constant 0 : index
    %c0_1 = arith.constant 0 : index
    %c0_2 = arith.constant 0 : index
    %0 = vector.load %arg1[%c0, %c0_0, %c0_1, %c0_2] : memref<1x8x8x128xf32, #tpu.memory_space<vmem>>, vector<1x8x8x128xf32>
    %1 = vector.shape_cast %0 : vector<1x8x8x128xf32> to vector<8x8x128xf32>
    %c0_3 = arith.constant 0 : index
    %c0_4 = arith.constant 0 : index
    %2 = vector.load %arg2[%c0_3, %c0_4] : memref<4x128xf32, #tpu.memory_space<vmem>>, vector<1x128xf32>
    %c1 = arith.constant 1 : index
    %c0_5 = arith.constant 0 : index
    %3 = vector.load %arg2[%c1, %c0_5] : memref<4x128xf32, #tpu.memory_space<vmem>>, vector<1x128xf32>
    %c2 = arith.constant 2 : index
    %c0_6 = arith.constant 0 : index
    %4 = vector.load %arg2[%c2, %c0_6] : memref<4x128xf32, #tpu.memory_space<vmem>>, vector<1x128xf32>
    %c3 = arith.constant 3 : index
    %c0_7 = arith.constant 0 : index
    %5 = vector.load %arg2[%c3, %c0_7] : memref<4x128xf32, #tpu.memory_space<vmem>>, vector<1x128xf32>
    %cst = arith.constant 0.000000e+00 : f32
    %6 = vector.broadcast %cst : f32 to vector<10x10x128xf32>
    %c0_8 = arith.constant 0 : index
    %c0_9 = arith.constant 0 : index
    %c0_10 = arith.constant 0 : index
    %7 = vector.load %arg6[%c0_8, %c0_9, %c0_10] : memref<10x10x128xf32, #tpu.memory_space<vmem>>, vector<10x10x128xf32>
    tpu.vector_store %arg6[%c0_8, %c0_9, %c0_10], %6 {strides = array<i32>} : memref<10x10x128xf32, #tpu.memory_space<vmem>>, vector<10x10x128xf32>,
    %8 = vector.shape_cast %2 : vector<1x128xf32> to vector<1x1x128xf32>
    %9 = vector.broadcast %8 : vector<1x1x128xf32> to vector<8x8x128xf32>
    %10 = arith.mulf %1, %9 : vector<8x8x128xf32>
    %11 = vector.shape_cast %3 : vector<1x128xf32> to vector<1x1x128xf32>
    %12 = vector.broadcast %11 : vector<1x1x128xf32> to vector<8x8x128xf32>
    %13 = arith.addf %10, %12 : vector<8x8x128xf32>
    %cst_11 = arith.constant 0.000000e+00 : f32
    %14 = vector.broadcast %cst_11 : f32 to vector<8x8x128xf32>
    %15 = arith.maximumf %13, %14 : vector<8x8x128xf32>
    %c1_12 = arith.constant 1 : index
    %c1_13 = arith.constant 1 : index
    %c0_14 = arith.constant 0 : index
    %16 = vector.load %arg6[%c1_12, %c1_13, %c0_14] : memref<10x10x128xf32, #tpu.memory_space<vmem>>, vector<8x8x128xf32>
    tpu.vector_store %arg6[%c1_12, %c1_13, %c0_14], %15 {strides = array<i32>} : memref<10x10x128xf32, #tpu.memory_space<vmem>>, vector<8x8x128xf32>,
    %c0_15 = arith.constant 0 : index
    %c0_16 = arith.constant 0 : index
    %c0_17 = arith.constant 0 : index
    %17 = vector.load %arg6[%c0_15, %c0_16, %c0_17] : memref<10x10x128xf32, #tpu.memory_space<vmem>>, vector<8x8x128xf32>
    %18 = vector.shape_cast %17 : vector<8x8x128xf32> to vector<64x128xf32>
    %c0_18 = arith.constant 0 : index
    %c1_19 = arith.constant 1 : index
    %c0_20 = arith.constant 0 : index
    %19 = vector.load %arg6[%c0_18, %c1_19, %c0_20] : memref<10x10x128xf32, #tpu.memory_space<vmem>>, vector<8x8x128xf32>
    %20 = vector.shape_cast %19 : vector<8x8x128xf32> to vector<64x128xf32>
    %c0_21 = arith.constant 0 : index
    %c2_22 = arith.constant 2 : index
    %c0_23 = arith.constant 0 : index
    %21 = vector.load %arg6[%c0_21, %c2_22, %c0_23] : memref<10x10x128xf32, #tpu.memory_space<vmem>>, vector<8x8x128xf32>
    %22 = vector.shape_cast %21 : vector<8x8x128xf32> to vector<64x128xf32>
    %c1_24 = arith.constant 1 : index
    %c0_25 = arith.constant 0 : index
    %c0_26 = arith.constant 0 : index
    %23 = vector.load %arg6[%c1_24, %c0_25, %c0_26] : memref<10x10x128xf32, #tpu.memory_space<vmem>>, vector<8x8x128xf32>
    %24 = vector.shape_cast %23 : vector<8x8x128xf32> to vector<64x128xf32>
    %c1_27 = arith.constant 1 : index
    %c1_28 = arith.constant 1 : index
    %c0_29 = arith.constant 0 : index
    %25 = vector.load %arg6[%c1_27, %c1_28, %c0_29] : memref<10x10x128xf32, #tpu.memory_space<vmem>>, vector<8x8x128xf32>
    %26 = vector.shape_cast %25 : vector<8x8x128xf32> to vector<64x128xf32>
    %c1_30 = arith.constant 1 : index
    %c2_31 = arith.constant 2 : index
    %c0_32 = arith.constant 0 : index
    %27 = vector.load %arg6[%c1_30, %c2_31, %c0_32] : memref<10x10x128xf32, #tpu.memory_space<vmem>>, vector<8x8x128xf32>
    %28 = vector.shape_cast %27 : vector<8x8x128xf32> to vector<64x128xf32>
    %c2_33 = arith.constant 2 : index
    %c0_34 = arith.constant 0 : index
    %c0_35 = arith.constant 0 : index
    %29 = vector.load %arg6[%c2_33, %c0_34, %c0_35] : memref<10x10x128xf32, #tpu.memory_space<vmem>>, vector<8x8x128xf32>
    %30 = vector.shape_cast %29 : vector<8x8x128xf32> to vector<64x128xf32>
    %c2_36 = arith.constant 2 : index
    %c1_37 = arith.constant 1 : index
    %c0_38 = arith.constant 0 : index
    %31 = vector.load %arg6[%c2_36, %c1_37, %c0_38] : memref<10x10x128xf32, #tpu.memory_space<vmem>>, vector<8x8x128xf32>
    %32 = vector.shape_cast %31 : vector<8x8x128xf32> to vector<64x128xf32>
    %c2_39 = arith.constant 2 : index
    %c2_40 = arith.constant 2 : index
    %c0_41 = arith.constant 0 : index
    %33 = vector.load %arg6[%c2_39, %c2_40, %c0_41] : memref<10x10x128xf32, #tpu.memory_space<vmem>>, vector<8x8x128xf32>
    %34 = vector.shape_cast %33 : vector<8x8x128xf32> to vector<64x128xf32>
    %35 = tpu.concatenate %18, %20, %22, %24, %26, %28, %30, %32, %34 in 1 : vector<64x128xf32>, vector<64x128xf32>, vector<64x128xf32>, vector<64x128xf32>, vector<64x128xf32>, vector<64x128xf32>, vector<64x128xf32>, vector<64x128xf32>, vector<64x128xf32> -> vector<64x1152xf32>
    %c0_42 = arith.constant 0 : index
    %c0_43 = arith.constant 0 : index
    %36 = vector.load %arg3[%c0_42, %c0_43] : memref<1152x128xf32, #tpu.memory_space<vmem>>, vector<1152x128xf32>
    %cst_44 = arith.constant dense<0.000000e+00> : vector<64x128xf32>
    %37 = tpu.matmul %35, %36, %cst_44 {dimension_numbers = #tpu.dot_dimension_numbers<[1], [0], [0], [1], [0, 0, 1, 1], [], []>} : vector<64x1152xf32>, vector<1152x128xf32>, vector<64x128xf32> -> vector<64x128xf32>
    %38 = vector.broadcast %4 : vector<1x128xf32> to vector<64x128xf32>
    %39 = arith.mulf %37, %38 : vector<64x128xf32>
    %40 = vector.broadcast %5 : vector<1x128xf32> to vector<64x128xf32>
    %41 = arith.addf %39, %40 : vector<64x128xf32>
    %cst_45 = arith.constant 0.000000e+00 : f32
    %42 = vector.broadcast %cst_45 : f32 to vector<64x128xf32>
    %43 = arith.maximumf %41, %42 : vector<64x128xf32>
    %44 = vector.shape_cast %43 : vector<64x128xf32> to vector<8x8x128xf32>
    %c1_46 = arith.constant 1 : index
    %c1_47 = arith.constant 1 : index
    %c0_48 = arith.constant 0 : index
    %45 = vector.load %arg6[%c1_46, %c1_47, %c0_48] : memref<10x10x128xf32, #tpu.memory_space<vmem>>, vector<8x8x128xf32>
    tpu.vector_store %arg6[%c1_46, %c1_47, %c0_48], %44 {strides = array<i32>} : memref<10x10x128xf32, #tpu.memory_space<vmem>>, vector<8x8x128xf32>,
    %c0_49 = arith.constant 0 : index
    %c0_50 = arith.constant 0 : index
    %c0_51 = arith.constant 0 : index
    %46 = vector.load %arg6[%c0_49, %c0_50, %c0_51] : memref<10x10x128xf32, #tpu.memory_space<vmem>>, vector<8x8x128xf32>
    %47 = vector.shape_cast %46 : vector<8x8x128xf32> to vector<64x128xf32>
    %c0_52 = arith.constant 0 : index
    %c1_53 = arith.constant 1 : index
    %c0_54 = arith.constant 0 : index
    %48 = vector.load %arg6[%c0_52, %c1_53, %c0_54] : memref<10x10x128xf32, #tpu.memory_space<vmem>>, vector<8x8x128xf32>
    %49 = vector.shape_cast %48 : vector<8x8x128xf32> to vector<64x128xf32>
    %c0_55 = arith.constant 0 : index
    %c2_56 = arith.constant 2 : index
    %c0_57 = arith.constant 0 : index
    %50 = vector.load %arg6[%c0_55, %c2_56, %c0_57] : memref<10x10x128xf32, #tpu.memory_space<vmem>>, vector<8x8x128xf32>
    %51 = vector.shape_cast %50 : vector<8x8x128xf32> to vector<64x128xf32>
    %c1_58 = arith.constant 1 : index
    %c0_59 = arith.constant 0 : index
    %c0_60 = arith.constant 0 : index
    %52 = vector.load %arg6[%c1_58, %c0_59, %c0_60] : memref<10x10x128xf32, #tpu.memory_space<vmem>>, vector<8x8x128xf32>
    %53 = vector.shape_cast %52 : vector<8x8x128xf32> to vector<64x128xf32>
    %c1_61 = arith.constant 1 : index
    %c1_62 = arith.constant 1 : index
    %c0_63 = arith.constant 0 : index
    %54 = vector.load %arg6[%c1_61, %c1_62, %c0_63] : memref<10x10x128xf32, #tpu.memory_space<vmem>>, vector<8x8x128xf32>
    %55 = vector.shape_cast %54 : vector<8x8x128xf32> to vector<64x128xf32>
    %c1_64 = arith.constant 1 : index
    %c2_65 = arith.constant 2 : index
    %c0_66 = arith.constant 0 : index
    %56 = vector.load %arg6[%c1_64, %c2_65, %c0_66] : memref<10x10x128xf32, #tpu.memory_space<vmem>>, vector<8x8x128xf32>
    %57 = vector.shape_cast %56 : vector<8x8x128xf32> to vector<64x128xf32>
    %c2_67 = arith.constant 2 : index
    %c0_68 = arith.constant 0 : index
    %c0_69 = arith.constant 0 : index
    %58 = vector.load %arg6[%c2_67, %c0_68, %c0_69] : memref<10x10x128xf32, #tpu.memory_space<vmem>>, vector<8x8x128xf32>
    %59 = vector.shape_cast %58 : vector<8x8x128xf32> to vector<64x128xf32>
    %c2_70 = arith.constant 2 : index
    %c1_71 = arith.constant 1 : index
    %c0_72 = arith.constant 0 : index
    %60 = vector.load %arg6[%c2_70, %c1_71, %c0_72] : memref<10x10x128xf32, #tpu.memory_space<vmem>>, vector<8x8x128xf32>
    %61 = vector.shape_cast %60 : vector<8x8x128xf32> to vector<64x128xf32>
    %c2_73 = arith.constant 2 : index
    %c2_74 = arith.constant 2 : index
    %c0_75 = arith.constant 0 : index
    %62 = vector.load %arg6[%c2_73, %c2_74, %c0_75] : memref<10x10x128xf32, #tpu.memory_space<vmem>>, vector<8x8x128xf32>
    %63 = vector.shape_cast %62 : vector<8x8x128xf32> to vector<64x128xf32>
    %64 = tpu.concatenate %47, %49, %51, %53, %55, %57, %59, %61, %63 in 1 : vector<64x128xf32>, vector<64x128xf32>, vector<64x128xf32>, vector<64x128xf32>, vector<64x128xf32>, vector<64x128xf32>, vector<64x128xf32>, vector<64x128xf32>, vector<64x128xf32> -> vector<64x1152xf32>
    %c0_76 = arith.constant 0 : index
    %c0_77 = arith.constant 0 : index
    %65 = vector.load %arg4[%c0_76, %c0_77] : memref<1152x128xf32, #tpu.memory_space<vmem>>, vector<1152x128xf32>
    %cst_78 = arith.constant dense<0.000000e+00> : vector<64x128xf32>
    %66 = tpu.matmul %64, %65, %cst_78 {dimension_numbers = #tpu.dot_dimension_numbers<[1], [0], [0], [1], [0, 0, 1, 1], [], []>} : vector<64x1152xf32>, vector<1152x128xf32>, vector<64x128xf32> -> vector<64x128xf32>
    %67 = vector.shape_cast %66 : vector<64x128xf32> to vector<8x8x128xf32>
    %68 = arith.addf %67, %1 : vector<8x8x128xf32>
    %c0_79 = arith.constant 0 : index
    %c0_80 = arith.constant 0 : index
    %c0_81 = arith.constant 0 : index
    %c0_82 = arith.constant 0 : index
    %69 = vector.load %arg5[%c0_79, %c0_80, %c0_81, %c0_82] : memref<1x8x8x128xf32, #tpu.memory_space<vmem>>, vector<1x8x8x128xf32>
    %70 = vector.shape_cast %69 : vector<1x8x8x128xf32> to vector<8x8x128xf32>
    %71 = vector.shape_cast %68 : vector<8x8x128xf32> to vector<1x8x8x128xf32>
    tpu.vector_store %arg5[%c0_79, %c0_80, %c0_81, %c0_82], %71 {strides = array<i32>} : memref<1x8x8x128xf32, #tpu.memory_space<vmem>>, vector<1x8x8x128xf32>,
    return
  }
  func.func @transform_0(%arg0: i32) -> (i32, i32, i32, i32) {
    %c0_i32 = arith.constant 0 : i32
    %c0_i32_0 = arith.constant 0 : i32
    %c0_i32_1 = arith.constant 0 : i32
    %c0_i32_2 = arith.constant 0 : i32
    return %arg0, %c0_i32, %c0_i32_0, %c0_i32_1 : i32, i32, i32, i32
  }
  func.func @transform_1(%arg0: i32) -> (i32, i32) {
    %c0_i32 = arith.constant 0 : i32
    %c0_i32_0 = arith.constant 0 : i32
    %c0_i32_1 = arith.constant 0 : i32
    return %c0_i32, %c0_i32_0 : i32, i32
  }
  func.func @transform_2(%arg0: i32) -> (i32, i32) {
    %c0_i32 = arith.constant 0 : i32
    %c0_i32_0 = arith.constant 0 : i32
    %c0_i32_1 = arith.constant 0 : i32
    return %c0_i32, %c0_i32_0 : i32, i32
  }
  func.func @transform_3(%arg0: i32) -> (i32, i32) {
    %c0_i32 = arith.constant 0 : i32
    %c0_i32_0 = arith.constant 0 : i32
    %c0_i32_1 = arith.constant 0 : i32
    return %c0_i32, %c0_i32_0 : i32, i32
  }
  func.func @transform_4(%arg0: i32) -> (i32, i32, i32, i32) {
    %c0_i32 = arith.constant 0 : i32
    %c0_i32_0 = arith.constant 0 : i32
    %c0_i32_1 = arith.constant 0 : i32
    %c0_i32_2 = arith.constant 0 : i32
    return %arg0, %c0_i32, %c0_i32_0, %c0_i32_1 : i32, i32, i32, i32
  }
}

</mosaic_0001>

<llo_original>
// kernel: basic_block_forward.1
$region0: #{basic_block_forward.1}
  #allocation0 [shape = 'u32[]', space=smem, size = 0x4, offset = 0x4, fixed_abs, tag = 'smem constant byte address 0x4 - core index']
  #allocation1 [shape = 'u32[144,128]{1,0:T(1,128)}', space=vmem, size = 0x12000, scoped, tag = 'internal scratch']
  #allocation2 [shape = 'f32[10,10,128]{2,1,0:T(8,128)}', space=vmem, size = 0x14000, scoped, tag = 'scratch operand']
  %s0 = inlined_call_operand.hbm [shape: f32[2,8,8,128], index: 0, kind: input, shape index: {}]
  %s1 = inlined_call_operand.vmem [shape: f32[4,128], index: 1, kind: input, shape index: {}]
  %s2 = inlined_call_operand.hbm [shape: f32[1152,128], index: 2, kind: input, shape index: {}]
  %s3 = inlined_call_operand.hbm [shape: f32[1152,128], index: 3, kind: input, shape index: {}]
  %s4 = inlined_call_operand.hbm [shape: f32[2,8,8,128], index: 4, kind: output, shape index: {}]
  %s5 = sld [smem:[#allocation0]]
  $region61: #{basic_block_forward.1} parent=0
    _
  %s7 = ssub.s32 1, %s5
  %s8 = scalar_select 0, %s7, %s5
  $region1: #{basic_block_forward.1} parent=0
    #allocation3 [shape = 'u8[65536]{0}', space=vmem, size = 0x10000, scoped, tag = 'input window, operand 0']
    #allocation4 [shape = 's32[2]{0}', space=sflag, size = 0x8, scoped, tag = 'scoped memory for basic_block_forward.1']
    #allocation5 [shape = 's32[2]{0}', space=sflag, size = 0x8, scoped, tag = 'scoped memory for basic_block_forward.1']
    #allocation6 [shape = 'u8[589824]{0}', space=vmem, size = 0x90000, scoped, tag = 'input window, operand 2, single buffered']
    #allocation7 [shape = 's32[1]{0}', space=sflag, size = 0x4, scoped, tag = 'scoped memory for basic_block_forward.1']
    #allocation8 [shape = 'u8[589824]{0}', space=vmem, size = 0x90000, scoped, tag = 'input window, operand 3, single buffered']
    #allocation9 [shape = 'u8[65536]{0}', space=vmem, size = 0x10000, scoped, tag = 'output window, operand 0']
    %9 = vsyncpa [#allocation4], 0
    %s10 = scalar_lea.sflag [#allocation4], 1
    %11 = vsyncpa %s10, 0
    %12 = vsyncpa [#allocation7], 0
    %13 = vsyncpa [#allocation5], 0
    %s14 = scalar_lea.sflag [#allocation5], 1
    %15 = vsyncpa %s14, 0
    loop: start=0, step=1, limit=4
    $region2: #{basic_block_forward.1} parent=1 // loop_pre_header
      _
    $region3: #{basic_block_forward.1} parent=1 // loop_header
      %s17 = sphi 0, %s21
      %p18 = scmp.ge.s32.totalorder %s17, 4
      %s27 = sphi 0, %s29
      %s30 = sphi 0, %s27
      %s31 = sphi 0, %s30
      %s47 = sphi 0, %s31
      %s51 = sphi 0, %s51
      %s53 = sphi 0, %s51
      %s54 = sphi 0, %s53
      %s68 = sphi 0, %s54
      %s72 = sphi 0, %s72
      %s74 = sphi 0, %s72
      %s75 = sphi 0, %s74
      %s89 = sphi 0, %s75
      %s93 = sphi 0, %s93
      %s95 = sphi 0, %s93
      %s96 = sphi 0, %s95
      %s110 = sphi 0, %s96
      %s116 = sphi 0, %s118
      %s119 = sphi 0, %s116
      %s120 = sphi 0, %s119
      %s136 = sphi 0, %s120
    $region4: #{basic_block_forward.1} parent=1 // loop_header_branch
      %20 = sbr.rel (%p18) target = $region8
    $region5: #{basic_block_forward.1} parent=1 // loop_body
      %s22 = ssub.s32 %s17, 1
      %s23 = ssub.s32 %s17, 2
      %s24 = sadd.s32 %s17, 1
      %s25 = ssub.s32 %s17, %s24
      %p26 = scmp.eq.s32.totalorder %s25, 0
      %s28 = sadd.s32 %s27, 1
      %s29 = scalar_select %p26, %s27, %s28
      %p32 = pneg %p26
      %p33 = scmp.eq.s32.totalorder %s17, 1
      %p34 = por %p32, %p33
      %p35 = scmp.ne.s32.totalorder %s27, %s30
      %p36 = scmp.eq.s32.totalorder %s17, 0
      %p37 = por %p35, %p36
      %p38 = scmp.ne.s32.totalorder %s27, %s30
      %p39 = scmp.eq.s32.totalorder %s22, 1
      %p40 = por %p38, %p39
      %p41 = scmp.ne.s32.totalorder %s30, %s31
      %p42 = scmp.eq.s32.totalorder %s22, 0
      %p43 = por %p41, %p42
      %p44 = scmp.ne.s32.totalorder %s30, %s31
      %p45 = scmp.eq.s32.totalorder %s23, 1
      %p46 = por %p44, %p45
      %p48 = scmp.ne.s32.totalorder %s31, %s47
      %p49 = scmp.eq.s32.totalorder %s23, 0
      %p50 = por %p48, %p49
      %s52 = sadd.s32 %s51, 1
      %p55 = scmp.eq.s32.totalorder %s17, 1
      %p56 = scmp.ne.s32.totalorder %s51, %s53
      %p57 = scmp.eq.s32.totalorder %s17, 0
      %p58 = por %p56, %p57
      %p59 = scmp.ne.s32.totalorder %s51, %s53
      %p60 = scmp.eq.s32.totalorder %s22, 1
      %p61 = por %p59, %p60
      %p62 = scmp.ne.s32.totalorder %s53, %s54
      %p63 = scmp.eq.s32.totalorder %s22, 0
      %p64 = por %p62, %p63
      %p65 = scmp.ne.s32.totalorder %s53, %s54
      %p66 = scmp.eq.s32.totalorder %s23, 1
      %p67 = por %p65, %p66
      %p69 = scmp.ne.s32.totalorder %s54, %s68
      %p70 = scmp.eq.s32.totalorder %s23, 0
      %p71 = por %p69, %p70
      %s73 = sadd.s32 %s72, 1
      %p76 = scmp.eq.s32.totalorder %s17, 1
      %p77 = scmp.ne.s32.totalorder %s72, %s74
      %p78 = scmp.eq.s32.totalorder %s17, 0
      %p79 = por %p77, %p78
      %p80 = scmp.ne.s32.totalorder %s72, %s74
      %p81 = scmp.eq.s32.totalorder %s22, 1
      %p82 = por %p80, %p81
      %p83 = scmp.ne.s32.totalorder %s74, %s75
      %p84 = scmp.eq.s32.totalorder %s22, 0
      %p85 = por %p83, %p84
      %p86 = scmp.ne.s32.totalorder %s74, %s75
      %p87 = scmp.eq.s32.totalorder %s23, 1
      %p88 = por %p86, %p87
      %p90 = scmp.ne.s32.totalorder %s75, %s89
      %p91 = scmp.eq.s32.totalorder %s23, 0
      %p92 = por %p90, %p91
      %s94 = sadd.s32 %s93, 1
      %p97 = scmp.eq.s32.totalorder %s17, 1
      %p98 = scmp.ne.s32.totalorder %s93, %s95
      %p99 = scmp.eq.s32.totalorder %s17, 0
      %p100 = por %p98, %p99
      %p101 = scmp.ne.s32.totalorder %s93, %s95
      %p102 = scmp.eq.s32.totalorder %s22, 1
      %p103 = por %p101, %p102
      %p104 = scmp.ne.s32.totalorder %s95, %s96
      %p105 = scmp.eq.s32.totalorder %s22, 0
      %p106 = por %p104, %p105
      %p107 = scmp.ne.s32.totalorder %s95, %s96
      %p108 = scmp.eq.s32.totalorder %s23, 1
      %p109 = por %p107, %p108
      %p111 = scmp.ne.s32.totalorder %s96, %s110
      %p112 = scmp.eq.s32.totalorder %s23, 0
      %p113 = por %p111, %p112
      %s114 = ssub.s32 %s17, %s24
      %p115 = scmp.eq.s32.totalorder %s114, 0
      %s117 = sadd.s32 %s116, 1
      %s118 = scalar_select %p115, %s116, %s117
      %p121 = pneg %p115
      %p122 = scmp.eq.s32.totalorder %s17, 1
      %p123 = por %p121, %p122
      %p124 = scmp.ne.s32.totalorder %s116, %s119
      %p125 = scmp.eq.s32.totalorder %s17, 0
      %p126 = por %p124, %p125
      %p127 = scmp.ne.s32.totalorder %s116, %s119
      %p128 = scmp.eq.s32.totalorder %s22, 1
      %p129 = por %p127, %p128
      %p130 = scmp.ne.s32.totalorder %s119, %s120
      %p131 = scmp.eq.s32.totalorder %s22, 0
      %p132 = por %p130, %p131
      %p133 = scmp.ne.s32.totalorder %s119, %s120
      %p134 = scmp.eq.s32.totalorder %s23, 1
      %p135 = por %p133, %p134
      %p137 = scmp.ne.s32.totalorder %s120, %s136
      %p138 = scmp.eq.s32.totalorder %s23, 0
      %p139 = por %p137, %p138
      %p140 = scmp.le.s32.totalorder 1, %s17
      %p141 = scmp.lt.s32.totalorder %s17, 3
      %p142 = pnand %p140, %p141
      %p143 = pneg %p142
      // Predicated region
      $region9: #{basic_block_forward.1} parent=5 // pred_check
        _
      $region10: #{basic_block_forward.1} parent=5 // pred_check_branch
        %145 = sbr.rel (%p142) target = $region12
      $region11: #{basic_block_forward.1} parent=5 // pred_region
        %s146 = ssub.s32 %s17, 1
        // Predicated region
        $region13: #{basic_block_forward.1} parent=11 // pred_check
          %p147 = pneg %p64
        $region14: #{basic_block_forward.1} parent=11 // pred_check_branch
          %149 = sbr.rel (%p147) target = $region16
        $region15: #{basic_block_forward.1} parent=11 // pred_region
          _
        $region16: #{basic_block_forward.1} parent=11 // pred_fallthru
          _
        // Predicated region
        $region17: #{basic_block_forward.1} parent=11 // pred_check
          %p150 = pneg %p85
        $region18: #{basic_block_forward.1} parent=11 // pred_check_branch
          %152 = sbr.rel (%p150) target = $region20
        $region19: #{basic_block_forward.1} parent=11 // pred_region
          %s154 = ssub.s32 18432, 18432
          %155 = vsyncadd [#allocation7], %s154
          %s156 = sshll.u32 [#allocation6], 4
          %s157 = int_to_ptr.vmem [resolvable:$true] %s156
          %162 = dma.hbm_to_vmem [thread:$0]  %s2, 18432, %s157, [#allocation7], 128, 128, 8
        $region20: #{basic_block_forward.1} parent=11 // pred_fallthru
          _
        // Predicated region
        $region21: #{basic_block_forward.1} parent=11 // pred_check
          %p163 = pneg %p106
        $region22: #{basic_block_forward.1} parent=11 // pred_check_branch
          %165 = sbr.rel (%p163) target = $region24
        $region23: #{basic_block_forward.1} parent=11 // pred_region
          %s167 = ssub.s32 18432, 18432
          %168 = vsyncadd [#allocation7], %s167
          %s169 = sshll.u32 [#allocation8], 4
          %s170 = int_to_ptr.vmem [resolvable:$true] %s169
          %175 = dma.hbm_to_vmem [thread:$0]  %s3, 18432, %s170, [#allocation7], 128, 128, 8
        $region24: #{basic_block_forward.1} parent=11 // pred_fallthru
          _
      $region12: #{basic_block_forward.1} parent=5 // pred_fallthru
        _
      %p176 = scmp.lt.s32.totalorder %s17, 2
      // Predicated region
      $region25: #{basic_block_forward.1} parent=5 // pred_check
        %p177 = pneg %p176
      $region26: #{basic_block_forward.1} parent=5 // pred_check_branch
        %179 = sbr.rel (%p177) target = $region28
      $region27: #{basic_block_forward.1} parent=5 // pred_region
        // Predicated region
        $region29: #{basic_block_forward.1} parent=27 // pred_check
          %p180 = pneg %p37
        $region30: #{basic_block_forward.1} parent=27 // pred_check_branch
          %182 = sbr.rel (%p180) target = $region32
        $region31: #{basic_block_forward.1} parent=27 // pred_region
          %s183 = sand.u32 %s27, 1
          %s184 = scalar_lea.sflag [#allocation4], %s183
          %s185 = sand.u32 %s27, 1
          %s186 = smul.addr %s185, 64
          %s187 = scalar_lea.vmem [#allocation3], %s186
          %s189 = ssub.s32 1024, 1024
          %190 = vsyncadd %s184, %s189
          %s191 = smul.addr %s17, 8
          %s192 = smul.addr %s191, 128
          %s193 = scalar_lea.hbm %s0, %s192
          %s194 = sshll.u32 %s187, 4
          %s195 = int_to_ptr.vmem [resolvable:$true] %s194
          %200 = dma.hbm_to_vmem [thread:$0]  %s193, 1024, %s195, %s184, 128, 128, 8
        $region32: #{basic_block_forward.1} parent=27 // pred_fallthru
          _
      $region28: #{basic_block_forward.1} parent=5 // pred_fallthru
        _
      %p201 = scmp.le.s32.totalorder 1, %s17
      %p202 = scmp.lt.s32.totalorder %s17, 3
      %p203 = pnand %p201, %p202
      %p204 = pneg %p203
      // Predicated region
      $region33: #{basic_block_forward.1} parent=5 // pred_check
        _
      $region34: #{basic_block_forward.1} parent=5 // pred_check_branch
        %206 = sbr.rel (%p203) target = $region36
      $region35: #{basic_block_forward.1} parent=5 // pred_region
        %s207 = ssub.s32 %s17, 1
        %s208 = sand.u32 %s30, 1
        %s209 = scalar_lea.sflag [#allocation4], %s208
        %s210 = sand.u32 %s30, 1
        %s211 = smul.addr %s210, 64
        %s212 = scalar_lea.vmem [#allocation3], %s211
        // Predicated region
        $region37: #{basic_block_forward.1} parent=35 // pred_check
          %p213 = pneg %p43
        $region38: #{basic_block_forward.1} parent=35 // pred_check_branch
          %215 = sbr.rel (%p213) target = $region40
        $region39: #{basic_block_forward.1} parent=35 // pred_region
          %216 = dma.done %s209, 1024
        $region40: #{basic_block_forward.1} parent=35 // pred_fallthru
          _
        // Predicated region
        $region41: #{basic_block_forward.1} parent=35 // pred_check
          %p217 = pneg %p85
        $region42: #{basic_block_forward.1} parent=35 // pred_check_branch
          %219 = sbr.rel (%p217) target = $region44
        $region43: #{basic_block_forward.1} parent=35 // pred_region
          %220 = dma.done [#allocation7], 18432
        $region44: #{basic_block_forward.1} parent=35 // pred_fallthru
          _
        // Predicated region
        $region45: #{basic_block_forward.1} parent=35 // pred_check
          %p221 = pneg %p106
        $region46: #{basic_block_forward.1} parent=35 // pred_check_branch
          %223 = sbr.rel (%p221) target = $region48
        $region47: #{basic_block_forward.1} parent=35 // pred_region
          %224 = dma.done [#allocation7], 18432
        $region48: #{basic_block_forward.1} parent=35 // pred_fallthru
          _
        %s225 = sand.u32 %s30, 1
        %s226 = scalar_lea.sflag [#allocation4], %s225
        %s227 = sand.u32 %s30, 1
        %s228 = smul.addr %s227, 64
        %s229 = scalar_lea.vmem [#allocation3], %s228
        %p230 = pneg %p43
        %p231 = pneg %p40
        %p232 = pneg %p64
        %p233 = pneg %p61
        %p234 = pneg %p85
        %p235 = pneg %p82
        %p236 = pneg %p106
        %p237 = pneg %p103
        %p238 = pneg %p132
        %p239 = pneg %p129
        %s240 = sand.u32 %s119, 1
        %s241 = scalar_lea.sflag [#allocation5], %s240
        %s242 = sand.u32 %s119, 1
        %s243 = smul.addr %s242, 64
        %s244 = scalar_lea.vmem [#allocation9], %s243
        %v245 = vld [vmem:[%s212] sm:$0xff]
        %v246 = vld [vmem:[%s212 + $0x8] sm:$0xff]
        %v247 = vld [vmem:[%s212 + $0x10] sm:$0xff]
        %v248 = vld [vmem:[%s212 + $0x18] sm:$0xff]
        %v249 = vld [vmem:[%s212 + $0x20] sm:$0xff]
        %v250 = vld [vmem:[%s212 + $0x28] sm:$0xff]
        %v251 = vld [vmem:[%s212 + $0x30] sm:$0xff]
        %v252 = vld [vmem:[%s212 + $0x38] sm:$0xff]
        %v253 = vld [vmem:[%s1] sm:$0x1]
        %v254 = vld [vmem:[%s1 + $0x1] sm:$0x1]
        %v255 = vld [vmem:[%s1 + $0x2] sm:$0x1]
        %v256 = vld [vmem:[%s1 + $0x3] sm:$0x1]
        %257 = vst [vmem:[#allocation2] sm:$0xff] 0.0
        %258 = vst [vmem:[#allocation2 + $0x8] sm:$0x3] 0.0
        %259 = vst [vmem:[#allocation2 + $0x10] sm:$0xff] 0.0
        %260 = vst [vmem:[#allocation2 + $0x18] sm:$0x3] 0.0
        %261 = vst [vmem:[#allocation2 + $0x20] sm:$0xff] 0.0
        %262 = vst [vmem:[#allocation2 + $0x28] sm:$0x3] 0.0
        %263 = vst [vmem:[#allocation2 + $0x30] sm:$0xff] 0.0
        %264 = vst [vmem:[#allocation2 + $0x38] sm:$0x3] 0.0
        %265 = vst [vmem:[#allocation2 + $0x40] sm:$0xff] 0.0
        %266 = vst [vmem:[#allocation2 + $0x48] sm:$0x3] 0.0
        %267 = vst [vmem:[#allocation2 + $0x50] sm:$0xff] 0.0
        %268 = vst [vmem:[#allocation2 + $0x58] sm:$0x3] 0.0
        %269 = vst [vmem:[#allocation2 + $0x60] sm:$0xff] 0.0
        %270 = vst [vmem:[#allocation2 + $0x68] sm:$0x3] 0.0
        %271 = vst [vmem:[#allocation2 + $0x70] sm:$0xff] 0.0
        %272 = vst [vmem:[#allocation2 + $0x78] sm:$0x3] 0.0
        %273 = vst [vmem:[#allocation2 + $0x80] sm:$0xff] 0.0
        %274 = vst [vmem:[#allocation2 + $0x88] sm:$0x3] 0.0
        %275 = vst [vmem:[#allocation2 + $0x90] sm:$0xff] 0.0
        %276 = vst [vmem:[#allocation2 + $0x98] sm:$0x3] 0.0
        %v277 = vlaneseq
        %v278 = vshrl.u32 %v277, 7
        %v279 = vsub.s32 0, %v278
        %v280 = vrot.slane %v253, %v279
        %v281 = vmul.f32 %v245, %v280
        %v282 = vmul.f32 %v246, %v280
        %v283 = vmul.f32 %v247, %v280
        %v284 = vmul.f32 %v248, %v280
        %v285 = vmul.f32 %v249, %v280
        %v286 = vmul.f32 %v250, %v280
        %v287 = vmul.f32 %v251, %v280
        %v288 = vmul.f32 %v252, %v280
        %v289 = vlaneseq
        %v290 = vshrl.u32 %v289, 7
        %v291 = vsub.s32 0, %v290
        %v292 = vrot.slane %v254, %v291
        %v293 = vadd.f32 %v281, %v292
        %v294 = vadd.f32 %v282, %v292
        %v295 = vadd.f32 %v283, %v292
        %v296 = vadd.f32 %v284, %v292
        %v297 = vadd.f32 %v285, %v292
        %v298 = vadd.f32 %v286, %v292
        %v299 = vadd.f32 %v287, %v292
        %v300 = vadd.f32 %v288, %v292
        %v301 = vmax.f32 %v293, 0.0
        %v302 = vmax.f32 %v294, 0.0
        %v303 = vmax.f32 %v295, 0.0
        %v304 = vmax.f32 %v296, 0.0
        %v305 = vmax.f32 %v297, 0.0
        %v306 = vmax.f32 %v298, 0.0
        %v307 = vmax.f32 %v299, 0.0
        %v308 = vmax.f32 %v300, 0.0
        %s309 = scalar_lea.vmem [#allocation2], 16
        %310 = vst [vmem:[%s309 + $0x1] sm:$0xff] %v301
        %311 = vst [vmem:[%s309 + $0x11] sm:$0xff] %v302
        %312 = vst [vmem:[%s309 + $0x21] sm:$0xff] %v303
        %313 = vst [vmem:[%s309 + $0x31] sm:$0xff] %v304
        %314 = vst [vmem:[%s309 + $0x41] sm:$0xff] %v305
        %315 = vst [vmem:[%s309 + $0x51] sm:$0xff] %v306
        %316 = vst [vmem:[%s309 + $0x61] sm:$0xff] %v307
        %317 = vst [vmem:[%s309 + $0x71] sm:$0xff] %v308
        %v318 = vld [vmem:[#allocation2] sm:$0xff]
        %v319 = vld [vmem:[#allocation2 + $0x10] sm:$0xff]
        %v320 = vld [vmem:[#allocation2 + $0x20] sm:$0xff]
        %v321 = vld [vmem:[#allocation2 + $0x30] sm:$0xff]
        %v322 = vld [vmem:[#allocation2 + $0x40] sm:$0xff]
        %v323 = vld [vmem:[#allocation2 + $0x50] sm:$0xff]
        %v324 = vld [vmem:[#allocation2 + $0x60] sm:$0xff]
        %v325 = vld [vmem:[#allocation2 + $0x70] sm:$0xff]
        %v326 = vld [vmem:[#allocation2 + $0x1] sm:$0xff]
        %v327 = vld [vmem:[#allocation2 + $0x11] sm:$0xff]
        %v328 = vld [vmem:[#allocation2 + $0x21] sm:$0xff]
        %v329 = vld [vmem:[#allocation2 + $0x31] sm:$0xff]
        %v330 = vld [vmem:[#allocation2 + $0x41] sm:$0xff]
        %v331 = vld [vmem:[#allocation2 + $0x51] sm:$0xff]
        %v332 = vld [vmem:[#allocation2 + $0x61] sm:$0xff]
        %v333 = vld [vmem:[#allocation2 + $0x71] sm:$0xff]
        %v334 = vld [vmem:[#allocation2 + $0x2] sm:$0xff]
        %v335 = vld [vmem:[#allocation2 + $0x12] sm:$0xff]
        %v336 = vld [vmem:[#allocation2 + $0x22] sm:$0xff]
        %v337 = vld [vmem:[#allocation2 + $0x32] sm:$0xff]
        %v338 = vld [vmem:[#allocation2 + $0x42] sm:$0xff]
        %v339 = vld [vmem:[#allocation2 + $0x52] sm:$0xff]
        %v340 = vld [vmem:[#allocation2 + $0x62] sm:$0xff]
        %v341 = vld [vmem:[#allocation2 + $0x72] sm:$0xff]
        %v342 = vld [vmem:[%s309] sm:$0xff]
        %v343 = vld [vmem:[%s309 + $0x10] sm:$0xff]
        %v344 = vld [vmem:[%s309 + $0x20] sm:$0xff]
        %v345 = vld [vmem:[%s309 + $0x30] sm:$0xff]
        %v346 = vld [vmem:[%s309 + $0x40] sm:$0xff]
        %v347 = vld [vmem:[%s309 + $0x50] sm:$0xff]
        %v348 = vld [vmem:[%s309 + $0x60] sm:$0xff]
        %v349 = vld [vmem:[%s309 + $0x70] sm:$0xff]
        %v350 = vld [vmem:[%s309 + $0x1] sm:$0xff]
        %v351 = vld [vmem:[%s309 + $0x11] sm:$0xff]
        %v352 = vld [vmem:[%s309 + $0x21] sm:$0xff]
        %v353 = vld [vmem:[%s309 + $0x31] sm:$0xff]
        %v354 = vld [vmem:[%s309 + $0x41] sm:$0xff]
        %v355 = vld [vmem:[%s309 + $0x51] sm:$0xff]
        %v356 = vld [vmem:[%s309 + $0x61] sm:$0xff]
        %v357 = vld [vmem:[%s309 + $0x71] sm:$0xff]
        %v358 = vld [vmem:[%s309 + $0x2] sm:$0xff]
        %v359 = vld [vmem:[%s309 + $0x12] sm:$0xff]
        %v360 = vld [vmem:[%s309 + $0x22] sm:$0xff]
        %v361 = vld [vmem:[%s309 + $0x32] sm:$0xff]
        %v362 = vld [vmem:[%s309 + $0x42] sm:$0xff]
        %v363 = vld [vmem:[%s309 + $0x52] sm:$0xff]
        %v364 = vld [vmem:[%s309 + $0x62] sm:$0xff]
        %v365 = vld [vmem:[%s309 + $0x72] sm:$0xff]
        %s366 = scalar_lea.vmem [#allocation2], 32
        %v367 = vld [vmem:[%s366] sm:$0xff]
        %v368 = vld [vmem:[%s366 + $0x10] sm:$0xff]
        %v369 = vld [vmem:[%s366 + $0x20] sm:$0xff]
        %v370 = vld [vmem:[%s366 + $0x30] sm:$0xff]
        %v371 = vld [vmem:[%s366 + $0x40] sm:$0xff]
        %v372 = vld [vmem:[%s366 + $0x50] sm:$0xff]
        %v373 = vld [vmem:[%s366 + $0x60] sm:$0xff]
        %v374 = vld [vmem:[%s366 + $0x70] sm:$0xff]
        %v375 = vld [vmem:[%s366 + $0x1] sm:$0xff]
        %v376 = vld [vmem:[%s366 + $0x11] sm:$0xff]
        %v377 = vld [vmem:[%s366 + $0x21] sm:$0xff]
        %v378 = vld [vmem:[%s366 + $0x31] sm:$0xff]
        %v379 = vld [vmem:[%s366 + $0x41] sm:$0xff]
        %v380 = vld [vmem:[%s366 + $0x51] sm:$0xff]
        %v381 = vld [vmem:[%s366 + $0x61] sm:$0xff]
        %v382 = vld [vmem:[%s366 + $0x71] sm:$0xff]
        %v383 = vld [vmem:[%s366 + $0x2] sm:$0xff]
        %v384 = vld [vmem:[%s366 + $0x12] sm:$0xff]
        %v385 = vld [vmem:[%s366 + $0x22] sm:$0xff]
        %v386 = vld [vmem:[%s366 + $0x32] sm:$0xff]
        %v387 = vld [vmem:[%s366 + $0x42] sm:$0xff]
        %v388 = vld [vmem:[%s366 + $0x52] sm:$0xff]
        %v389 = vld [vmem:[%s366 + $0x62] sm:$0xff]
        %v390 = vld [vmem:[%s366 + $0x72] sm:$0xff]
        %v391 = vld [vmem:[#allocation6] sm:$0xff]
        %v392 = vld [vmem:[#allocation6 + $0x8] sm:$0xff]
        %v393 = vld [vmem:[#allocation6 + $0x10] sm:$0xff]
        %v394 = vld [vmem:[#allocation6 + $0x18] sm:$0xff]
        %v395 = vld [vmem:[#allocation6 + $0x20] sm:$0xff]
        %v396 = vld [vmem:[#allocation6 + $0x28] sm:$0xff]
        %v397 = vld [vmem:[#allocation6 + $0x30] sm:$0xff]
        %v398 = vld [vmem:[#allocation6 + $0x38] sm:$0xff]
        %v399 = vld [vmem:[#allocation6 + $0x40] sm:$0xff]
        %v400 = vld [vmem:[#allocation6 + $0x48] sm:$0xff]
        %v401 = vld [vmem:[#allocation6 + $0x50] sm:$0xff]
        %v402 = vld [vmem:[#allocation6 + $0x58] sm:$0xff]
        %v403 = vld [vmem:[#allocation6 + $0x60] sm:$0xff]
        %v404 = vld [vmem:[#allocation6 + $0x68] sm:$0xff]
        %v405 = vld [vmem:[#allocation6 + $0x70] sm:$0xff]
        %v406 = vld [vmem:[#allocation6 + $0x78] sm:$0xff]
        %v407 = vld [vmem:[#allocation6 + $0x80] sm:$0xff]
        %v408 = vld [vmem:[#allocation6 + $0x88] sm:$0xff]
        %v409 = vld [vmem:[#allocation6 + $0x90] sm:$0xff]
        %v410 = vld [vmem:[#allocation6 + $0x98] sm:$0xff]
        %v411 = vld [vmem:[#allocation6 + $0xa0] sm:$0xff]
        %v412 = vld [vmem:[#allocation6 + $0xa8] sm:$0xff]
        %v413 = vld [vmem:[#allocation6 + $0xb0] sm:$0xff]
        %v414 = vld [vmem:[#allocation6 + $0xb8] sm:$0xff]
        %v415 = vld [vmem:[#allocation6 + $0xc0] sm:$0xff]
        %v416 = vld [vmem:[#allocation6 + $0xc8] sm:$0xff]
        %v417 = vld [vmem:[#allocation6 + $0xd0] sm:$0xff]
        %v418 = vld [vmem:[#allocation6 + $0xd8] sm:$0xff]
        %v419 = vld [vmem:[#allocation6 + $0xe0] sm:$0xff]
        %v420 = vld [vmem:[#allocation6 + $0xe8] sm:$0xff]
        %v421 = vld [vmem:[#allocation6 + $0xf0] sm:$0xff]
        %v422 = vld [vmem:[#allocation6 + $0xf8] sm:$0xff]
        %v423 = vld [vmem:[#allocation6 + $0x100] sm:$0xff]
        %v424 = vld [vmem:[#allocation6 + $0x108] sm:$0xff]
        %v425 = vld [vmem:[#allocation6 + $0x110] sm:$0xff]
        %v426 = vld [vmem:[#allocation6 + $0x118] sm:$0xff]
        %v427 = vld [vmem:[#allocation6 + $0x120] sm:$0xff]
        %v428 = vld [vmem:[#allocation6 + $0x128] sm:$0xff]
        %v429 = vld [vmem:[#allocation6 + $0x130] sm:$0xff]
        %v430 = vld [vmem:[#allocation6 + $0x138] sm:$0xff]
        %v431 = vld [vmem:[#allocation6 + $0x140] sm:$0xff]
        %v432 = vld [vmem:[#allocation6 + $0x148] sm:$0xff]
        %v433 = vld [vmem:[#allocation6 + $0x150] sm:$0xff]
        %v434 = vld [vmem:[#allocation6 + $0x158] sm:$0xff]
        %v435 = vld [vmem:[#allocation6 + $0x160] sm:$0xff]
        %v436 = vld [vmem:[#allocation6 + $0x168] sm:$0xff]
        %v437 = vld [vmem:[#allocation6 + $0x170] sm:$0xff]
        %v438 = vld [vmem:[#allocation6 + $0x178] sm:$0xff]
        %v439 = vld [vmem:[#allocation6 + $0x180] sm:$0xff]
        %v440 = vld [vmem:[#allocation6 + $0x188] sm:$0xff]
        %v441 = vld [vmem:[#allocation6 + $0x190] sm:$0xff]
        %v442 = vld [vmem:[#allocation6 + $0x198] sm:$0xff]
        %v443 = vld [vmem:[#allocation6 + $0x1a0] sm:$0xff]
        %v444 = vld [vmem:[#allocation6 + $0x1a8] sm:$0xff]
        %v445 = vld [vmem:[#allocation6 + $0x1b0] sm:$0xff]
        %v446 = vld [vmem:[#allocation6 + $0x1b8] sm:$0xff]
        %v447 = vld [vmem:[#allocation6 + $0x1c0] sm:$0xff]
        %v448 = vld [vmem:[#allocation6 + $0x1c8] sm:$0xff]
        %v449 = vld [vmem:[#allocation6 + $0x1d0] sm:$0xff]
        %v450 = vld [vmem:[#allocation6 + $0x1d8] sm:$0xff]
        %v451 = vld [vmem:[#allocation6 + $0x1e0] sm:$0xff]
        %v452 = vld [vmem:[#allocation6 + $0x1e8] sm:$0xff]
        %v453 = vld [vmem:[#allocation6 + $0x1f0] sm:$0xff]
        %v454 = vld [vmem:[#allocation6 + $0x1f8] sm:$0xff]
        %v455 = vld [vmem:[#allocation6 + $0x200] sm:$0xff]
        %v456 = vld [vmem:[#allocation6 + $0x208] sm:$0xff]
        %v457 = vld [vmem:[#allocation6 + $0x210] sm:$0xff]
        %v458 = vld [vmem:[#allocation6 + $0x218] sm:$0xff]
        %v459 = vld [vmem:[#allocation6 + $0x220] sm:$0xff]
        %v460 = vld [vmem:[#allocation6 + $0x228] sm:$0xff]
        %v461 = vld [vmem:[#allocation6 + $0x230] sm:$0xff]
        %v462 = vld [vmem:[#allocation6 + $0x238] sm:$0xff]
        %v463 = vld [vmem:[#allocation6 + $0x240] sm:$0xff]
        %v464 = vld [vmem:[#allocation6 + $0x248] sm:$0xff]
        %v465 = vld [vmem:[#allocation6 + $0x250] sm:$0xff]
        %v466 = vld [vmem:[#allocation6 + $0x258] sm:$0xff]
        %v467 = vld [vmem:[#allocation6 + $0x260] sm:$0xff]
        %v468 = vld [vmem:[#allocation6 + $0x268] sm:$0xff]
        %v469 = vld [vmem:[#allocation6 + $0x270] sm:$0xff]
        %v470 = vld [vmem:[#allocation6 + $0x278] sm:$0xff]
        %v471 = vld [vmem:[#allocation6 + $0x280] sm:$0xff]
        %v472 = vld [vmem:[#allocation6 + $0x288] sm:$0xff]
        %v473 = vld [vmem:[#allocation6 + $0x290] sm:$0xff]
        %v474 = vld [vmem:[#allocation6 + $0x298] sm:$0xff]
        %v475 = vld [vmem:[#allocation6 + $0x2a0] sm:$0xff]
        %v476 = vld [vmem:[#allocation6 + $0x2a8] sm:$0xff]
        %v477 = vld [vmem:[#allocation6 + $0x2b0] sm:$0xff]
        %v478 = vld [vmem:[#allocation6 + $0x2b8] sm:$0xff]
        %v479 = vld [vmem:[#allocation6 + $0x2c0] sm:$0xff]
        %v480 = vld [vmem:[#allocation6 + $0x2c8] sm:$0xff]
        %v481 = vld [vmem:[#allocation6 + $0x2d0] sm:$0xff]
        %v482 = vld [vmem:[#allocation6 + $0x2d8] sm:$0xff]
        %v483 = vld [vmem:[#allocation6 + $0x2e0] sm:$0xff]
        %v484 = vld [vmem:[#allocation6 + $0x2e8] sm:$0xff]
        %v485 = vld [vmem:[#allocation6 + $0x2f0] sm:$0xff]
        %v486 = vld [vmem:[#allocation6 + $0x2f8] sm:$0xff]
        %v487 = vld [vmem:[#allocation6 + $0x300] sm:$0xff]
        %v488 = vld [vmem:[#allocation6 + $0x308] sm:$0xff]
        %v489 = vld [vmem:[#allocation6 + $0x310] sm:$0xff]
        %v490 = vld [vmem:[#allocation6 + $0x318] sm:$0xff]
        %v491 = vld [vmem:[#allocation6 + $0x320] sm:$0xff]
        %v492 = vld [vmem:[#allocation6 + $0x328] sm:$0xff]
        %v493 = vld [vmem:[#allocation6 + $0x330] sm:$0xff]
        %v494 = vld [vmem:[#allocation6 + $0x338] sm:$0xff]
        %v495 = vld [vmem:[#allocation6 + $0x340] sm:$0xff]
        %v496 = vld [vmem:[#allocation6 + $0x348] sm:$0xff]
        %v497 = vld [vmem:[#allocation6 + $0x350] sm:$0xff]
        %v498 = vld [vmem:[#allocation6 + $0x358] sm:$0xff]
        %v499 = vld [vmem:[#allocation6 + $0x360] sm:$0xff]
        %v500 = vld [vmem:[#allocation6 + $0x368] sm:$0xff]
        %v501 = vld [vmem:[#allocation6 + $0x370] sm:$0xff]
        %v502 = vld [vmem:[#allocation6 + $0x378] sm:$0xff]
        %v503 = vld [vmem:[#allocation6 + $0x380] sm:$0xff]
        %v504 = vld [vmem:[#allocation6 + $0x388] sm:$0xff]
        %v505 = vld [vmem:[#allocation6 + $0x390] sm:$0xff]
        %v506 = vld [vmem:[#allocation6 + $0x398] sm:$0xff]
        %v507 = vld [vmem:[#allocation6 + $0x3a0] sm:$0xff]
        %v508 = vld [vmem:[#allocation6 + $0x3a8] sm:$0xff]
        %v509 = vld [vmem:[#allocation6 + $0x3b0] sm:$0xff]
        %v510 = vld [vmem:[#allocation6 + $0x3b8] sm:$0xff]
        %v511 = vld [vmem:[#allocation6 + $0x3c0] sm:$0xff]
        %v512 = vld [vmem:[#allocation6 + $0x3c8] sm:$0xff]
        %v513 = vld [vmem:[#allocation6 + $0x3d0] sm:$0xff]
        %v514 = vld [vmem:[#allocation6 + $0x3d8] sm:$0xff]
        %v515 = vld [vmem:[#allocation6 + $0x3e0] sm:$0xff]
        %v516 = vld [vmem:[#allocation6 + $0x3e8] sm:$0xff]
        %v517 = vld [vmem:[#allocation6 + $0x3f0] sm:$0xff]
        %v518 = vld [vmem:[#allocation6 + $0x3f8] sm:$0xff]
        %v519 = vld [vmem:[#allocation6 + $0x400] sm:$0xff]
        %v520 = vld [vmem:[#allocation6 + $0x408] sm:$0xff]
        %v521 = vld [vmem:[#allocation6 + $0x410] sm:$0xff]
        %v522 = vld [vmem:[#allocation6 + $0x418] sm:$0xff]
        %v523 = vld [vmem:[#allocation6 + $0x420] sm:$0xff]
        %v524 = vld [vmem:[#allocation6 + $0x428] sm:$0xff]
        %v525 = vld [vmem:[#allocation6 + $0x430] sm:$0xff]
        %v526 = vld [vmem:[#allocation6 + $0x438] sm:$0xff]
        %v527 = vld [vmem:[#allocation6 + $0x440] sm:$0xff]
        %v528 = vld [vmem:[#allocation6 + $0x448] sm:$0xff]
        %v529 = vld [vmem:[#allocation6 + $0x450] sm:$0xff]
        %v530 = vld [vmem:[#allocation6 + $0x458] sm:$0xff]
        %v531 = vld [vmem:[#allocation6 + $0x460] sm:$0xff]
        %v532 = vld [vmem:[#allocation6 + $0x468] sm:$0xff]
        %v533 = vld [vmem:[#allocation6 + $0x470] sm:$0xff]
        %v534 = vld [vmem:[#allocation6 + $0x478] sm:$0xff]
        %535 = vmatprep.subr.mxu0 0.0
        %536 = vmatpush1.msra.mxu0 %v391
        %537 = vmatprep.subr.mxu0 0.0
        %538 = vmatpush1.msra.mxu0 %v392
        %539 = vmatprep.subr.mxu0 0.0
        %540 = vmatpush1.msra.mxu0 %v393
        %541 = vmatprep.subr.mxu0 0.0
        %542 = vmatpush1.msra.mxu0 %v394
        %543 = vmatprep.subr.mxu0 0.0
        %544 = vmatpush1.msra.mxu0 %v395
        %545 = vmatprep.subr.mxu0 0.0
        %546 = vmatpush1.msra.mxu0 %v396
        %547 = vmatprep.subr.mxu0 0.0
        %548 = vmatpush1.msra.mxu0 %v397
        %549 = vmatprep.subr.mxu0 0.0
        %550 = vmatpush1.msra.mxu0 %v398
        %551 = vmatprep.subr.mxu0 0.0
        %552 = vmatpush1.msra.mxu0 %v399
        %553 = vmatprep.subr.mxu0 0.0
        %554 = vmatpush1.msra.mxu0 %v400
        %555 = vmatprep.subr.mxu0 0.0
        %556 = vmatpush1.msra.mxu0 %v401
        %557 = vmatprep.subr.mxu0 0.0
        %558 = vmatpush1.msra.mxu0 %v402
        %559 = vmatprep.subr.mxu0 0.0
        %560 = vmatpush1.msra.mxu0 %v403
        %561 = vmatprep.subr.mxu0 0.0
        %562 = vmatpush1.msra.mxu0 %v404
        %563 = vmatprep.subr.mxu0 0.0
        %564 = vmatpush1.msra.mxu0 %v405
        %565 = vmatprep.subr.mxu0 0.0
        %566 = vmatpush1.msra.mxu0 %v406
        %567 = vmatprep.subr.mxu0 0.0
        %568 = vmatpush1.msra.mxu0 %v407
        %569 = vmatprep.subr.mxu0 0.0
        %570 = vmatpush1.msra.mxu0 %v408
        %571 = vmatprep.subr.mxu0 0.0
        %572 = vmatpush1.msra.mxu0 %v409
        %573 = vmatprep.subr.mxu0 0.0
        %574 = vmatpush1.msra.mxu0 %v410
        %575 = vmatprep.subr.mxu0 0.0
        %576 = vmatpush1.msra.mxu0 %v411
        %577 = vmatprep.subr.mxu0 0.0
        %578 = vmatpush1.msra.mxu0 %v412
        %579 = vmatprep.subr.mxu0 0.0
        %580 = vmatpush1.msra.mxu0 %v413
        %581 = vmatprep.subr.mxu0 0.0
        %582 = vmatpush1.msra.mxu0 %v414
        %583 = vmatprep.subr.mxu0 0.0
        %584 = vmatpush1.msra.mxu0 %v415
        %585 = vmatprep.subr.mxu0 0.0
        %586 = vmatpush1.msra.mxu0 %v416
        %587 = vmatprep.subr.mxu0 0.0
        %588 = vmatpush1.msra.mxu0 %v417
        %589 = vmatprep.subr.mxu0 0.0
        %590 = vmatpush1.msra.mxu0 %v418
        %591 = vmatprep.subr.mxu0 0.0
        %592 = vmatpush1.msra.mxu0 %v419
        %593 = vmatprep.subr.mxu0 0.0
        %594 = vmatpush1.msra.mxu0 %v420
        %595 = vmatprep.subr.mxu0 0.0
        %596 = vmatpush1.msra.mxu0 %v421
        %597 = vmatprep.subr.mxu0 0.0
        %598 = vmatpush1.msra.mxu0 %v422
        %599 = vmatprep.mubr.f32.mxu0 %v326
        %600 = vmatmul.mubr.f32.gmra.mrb[0].mxu0 %v318
        %v601 = vpop.f32.mrb[0].mxu0
        %v602 = vadd.f32 0.0, %v601
        %v603 = vpop.f32.mrb[0].mxu0
        %604 = vmatprep.mubr.f32.mxu0 %v327
        %605 = vmatmul.mubr.f32.gmra.mrb[0].mxu0 %v319
        %v606 = vpop.f32.mrb[0].mxu0
        %v607 = vadd.f32 0.0, %v606
        %v608 = vpop.f32.mrb[0].mxu0
        %609 = vmatprep.mubr.f32.mxu0 %v328
        %610 = vmatmul.mubr.f32.gmra.mrb[0].mxu0 %v320
        %v611 = vpop.f32.mrb[0].mxu0
        %v612 = vadd.f32 0.0, %v611
        %v613 = vpop.f32.mrb[0].mxu0
        %614 = vmatprep.mubr.f32.mxu0 %v329
        %615 = vmatmul.mubr.f32.gmra.mrb[0].mxu0 %v321
        %v616 = vpop.f32.mrb[0].mxu0
        %v617 = vadd.f32 0.0, %v616
        %v618 = vpop.f32.mrb[0].mxu0
        %619 = vmatprep.mubr.f32.mxu0 %v330
        %620 = vmatmul.mubr.f32.gmra.mrb[0].mxu0 %v322
        %v621 = vpop.f32.mrb[0].mxu0
        %v622 = vadd.f32 0.0, %v621
        %v623 = vpop.f32.mrb[0].mxu0
        %624 = vmatprep.mubr.f32.mxu0 %v331
        %625 = vmatmul.mubr.f32.gmra.mrb[0].mxu0 %v323
        %v626 = vpop.f32.mrb[0].mxu0
        %v627 = vadd.f32 0.0, %v626
        %v628 = vpop.f32.mrb[0].mxu0
        %629 = vmatprep.mubr.f32.mxu0 %v332
        %630 = vmatmul.mubr.f32.gmra.mrb[0].mxu0 %v324
        %v631 = vpop.f32.mrb[0].mxu0
        %v632 = vadd.f32 0.0, %v631
        %v633 = vpop.f32.mrb[0].mxu0
        %634 = vmatprep.mubr.f32.mxu0 %v333
        %635 = vmatmul.mubr.f32.gmra.mrb[0].mxu0 %v325
        %v636 = vpop.f32.mrb[0].mxu0
        %v637 = vadd.f32 0.0, %v636
        %v638 = vpop.f32.mrb[0].mxu0
        %639 = vdwg.mxu0
        %640 = vmatprep.subr.mxu0 0.0
        %641 = vmatpush1.msra.mxu0 %v423
        %642 = vmatprep.subr.mxu0 0.0
        %643 = vmatpush1.msra.mxu0 %v424
        %644 = vmatprep.subr.mxu0 0.0
        %645 = vmatpush1.msra.mxu0 %v425
        %646 = vmatprep.subr.mxu0 0.0
        %647 = vmatpush1.msra.mxu0 %v426
        %648 = vmatprep.subr.mxu0 0.0
        %649 = vmatpush1.msra.mxu0 %v427
        %650 = vmatprep.subr.mxu0 0.0
        %651 = vmatpush1.msra.mxu0 %v428
        %652 = vmatprep.subr.mxu0 0.0
        %653 = vmatpush1.msra.mxu0 %v429
        %654 = vmatprep.subr.mxu0 0.0
        %655 = vmatpush1.msra.mxu0 %v430
        %656 = vmatprep.subr.mxu0 0.0
        %657 = vmatpush1.msra.mxu0 %v431
        %658 = vmatprep.subr.mxu0 0.0
        %659 = vmatpush1.msra.mxu0 %v432
        %660 = vmatprep.subr.mxu0 0.0
        %661 = vmatpush1.msra.mxu0 %v433
        %662 = vmatprep.subr.mxu0 0.0
        %663 = vmatpush1.msra.mxu0 %v434
        %664 = vmatprep.subr.mxu0 0.0
        %665 = vmatpush1.msra.mxu0 %v435
        %666 = vmatprep.subr.mxu0 0.0
        %667 = vmatpush1.msra.mxu0 %v436
        %668 = vmatprep.subr.mxu0 0.0
        %669 = vmatpush1.msra.mxu0 %v437
        %670 = vmatprep.subr.mxu0 0.0
        %671 = vmatpush1.msra.mxu0 %v438
        %672 = vmatprep.subr.mxu0 0.0
        %673 = vmatpush1.msra.mxu0 %v439
        %674 = vmatprep.subr.mxu0 0.0
        %675 = vmatpush1.msra.mxu0 %v440
        %676 = vmatprep.subr.mxu0 0.0
        %677 = vmatpush1.msra.mxu0 %v441
        %678 = vmatprep.subr.mxu0 0.0
        %679 = vmatpush1.msra.mxu0 %v442
        %680 = vmatprep.subr.mxu0 0.0
        %681 = vmatpush1.msra.mxu0 %v443
        %682 = vmatprep.subr.mxu0 0.0
        %683 = vmatpush1.msra.mxu0 %v444
        %684 = vmatprep.subr.mxu0 0.0
        %685 = vmatpush1.msra.mxu0 %v445
        %686 = vmatprep.subr.mxu0 0.0
        %687 = vmatpush1.msra.mxu0 %v446
        %688 = vmatprep.subr.mxu0 0.0
        %689 = vmatpush1.msra.mxu0 %v447
        %690 = vmatprep.subr.mxu0 0.0
        %691 = vmatpush1.msra.mxu0 %v448
        %692 = vmatprep.subr.mxu0 0.0
        %693 = vmatpush1.msra.mxu0 %v449
        %694 = vmatprep.subr.mxu0 0.0
        %695 = vmatpush1.msra.mxu0 %v450
        %696 = vmatprep.subr.mxu0 0.0
        %697 = vmatpush1.msra.mxu0 %v451
        %698 = vmatprep.subr.mxu0 0.0
        %699 = vmatpush1.msra.mxu0 %v452
        %700 = vmatprep.subr.mxu0 0.0
        %701 = vmatpush1.msra.mxu0 %v453
        %702 = vmatprep.subr.mxu0 0.0
        %703 = vmatpush1.msra.mxu0 %v454
        %704 = vmatprep.mubr.f32.mxu0 %v342
        %705 = vmatmul.mubr.f32.gmra.mrb[0].mxu0 %v334
        %v706 = vpop.f32.mrb[0].mxu0
        %v707 = vadd.f32 %v602, %v706
        %v708 = vpop.f32.mrb[0].mxu0
        %709 = vmatprep.mubr.f32.mxu0 %v343
        %710 = vmatmul.mubr.f32.gmra.mrb[0].mxu0 %v335
        %v711 = vpop.f32.mrb[0].mxu0
        %v712 = vadd.f32 %v607, %v711
        %v713 = vpop.f32.mrb[0].mxu0
        %714 = vmatprep.mubr.f32.mxu0 %v344
        %715 = vmatmul.mubr.f32.gmra.mrb[0].mxu0 %v336
        %v716 = vpop.f32.mrb[0].mxu0
        %v717 = vadd.f32 %v612, %v716
        %v718 = vpop.f32.mrb[0].mxu0
        %719 = vmatprep.mubr.f32.mxu0 %v345
        %720 = vmatmul.mubr.f32.gmra.mrb[0].mxu0 %v337
        %v721 = vpop.f32.mrb[0].mxu0
        %v722 = vadd.f32 %v617, %v721
        %v723 = vpop.f32.mrb[0].mxu0
        %724 = vmatprep.mubr.f32.mxu0 %v346
        %725 = vmatmul.mubr.f32.gmra.mrb[0].mxu0 %v338
        %v726 = vpop.f32.mrb[0].mxu0
        %v727 = vadd.f32 %v622, %v726
        %v728 = vpop.f32.mrb[0].mxu0
        %729 = vmatprep.mubr.f32.mxu0 %v347
        %730 = vmatmul.mubr.f32.gmra.mrb[0].mxu0 %v339
        %v731 = vpop.f32.mrb[0].mxu0
        %v732 = vadd.f32 %v627, %v731
        %v733 = vpop.f32.mrb[0].mxu0
        %734 = vmatprep.mubr.f32.mxu0 %v348
        %735 = vmatmul.mubr.f32.gmra.mrb[0].mxu0 %v340
        %v736 = vpop.f32.mrb[0].mxu0
        %v737 = vadd.f32 %v632, %v736
        %v738 = vpop.f32.mrb[0].mxu0
        %739 = vmatprep.mubr.f32.mxu0 %v349
        %740 = vmatmul.mubr.f32.gmra.mrb[0].mxu0 %v341
        %v741 = vpop.f32.mrb[0].mxu0
        %v742 = vadd.f32 %v637, %v741
        %v743 = vpop.f32.mrb[0].mxu0
        %744 = vdwg.mxu0
        %745 = vmatprep.subr.mxu0 0.0
        %746 = vmatpush1.msra.mxu0 %v455
        %747 = vmatprep.subr.mxu0 0.0
        %748 = vmatpush1.msra.mxu0 %v456
        %749 = vmatprep.subr.mxu0 0.0
        %750 = vmatpush1.msra.mxu0 %v457
        %751 = vmatprep.subr.mxu0 0.0
        %752 = vmatpush1.msra.mxu0 %v458
        %753 = vmatprep.subr.mxu0 0.0
        %754 = vmatpush1.msra.mxu0 %v459
        %755 = vmatprep.subr.mxu0 0.0
        %756 = vmatpush1.msra.mxu0 %v460
        %757 = vmatprep.subr.mxu0 0.0
        %758 = vmatpush1.msra.mxu0 %v461
        %759 = vmatprep.subr.mxu0 0.0
        %760 = vmatpush1.msra.mxu0 %v462
        %761 = vmatprep.subr.mxu0 0.0
        %762 = vmatpush1.msra.mxu0 %v463
        %763 = vmatprep.subr.mxu0 0.0
        %764 = vmatpush1.msra.mxu0 %v464
        %765 = vmatprep.subr.mxu0 0.0
        %766 = vmatpush1.msra.mxu0 %v465
        %767 = vmatprep.subr.mxu0 0.0
        %768 = vmatpush1.msra.mxu0 %v466
        %769 = vmatprep.subr.mxu0 0.0
        %770 = vmatpush1.msra.mxu0 %v467
        %771 = vmatprep.subr.mxu0 0.0
        %772 = vmatpush1.msra.mxu0 %v468
        %773 = vmatprep.subr.mxu0 0.0
        %774 = vmatpush1.msra.mxu0 %v469
        %775 = vmatprep.subr.mxu0 0.0
        %776 = vmatpush1.msra.mxu0 %v470
        %777 = vmatprep.subr.mxu0 0.0
        %778 = vmatpush1.msra.mxu0 %v471
        %779 = vmatprep.subr.mxu0 0.0
        %780 = vmatpush1.msra.mxu0 %v472
        %781 = vmatprep.subr.mxu0 0.0
        %782 = vmatpush1.msra.mxu0 %v473
        %783 = vmatprep.subr.mxu0 0.0
        %784 = vmatpush1.msra.mxu0 %v474
        %785 = vmatprep.subr.mxu0 0.0
        %786 = vmatpush1.msra.mxu0 %v475
        %787 = vmatprep.subr.mxu0 0.0
        %788 = vmatpush1.msra.mxu0 %v476
        %789 = vmatprep.subr.mxu0 0.0
        %790 = vmatpush1.msra.mxu0 %v477
        %791 = vmatprep.subr.mxu0 0.0
        %792 = vmatpush1.msra.mxu0 %v478
        %793 = vmatprep.subr.mxu0 0.0
        %794 = vmatpush1.msra.mxu0 %v479
        %795 = vmatprep.subr.mxu0 0.0
        %796 = vmatpush1.msra.mxu0 %v480
        %797 = vmatprep.subr.mxu0 0.0
        %798 = vmatpush1.msra.mxu0 %v481
        %799 = vmatprep.subr.mxu0 0.0
        %800 = vmatpush1.msra.mxu0 %v482
        %801 = vmatprep.subr.mxu0 0.0
        %802 = vmatpush1.msra.mxu0 %v483
        %803 = vmatprep.subr.mxu0 0.0
        %804 = vmatpush1.msra.mxu0 %v484
        %805 = vmatprep.subr.mxu0 0.0
        %806 = vmatpush1.msra.mxu0 %v485
        %807 = vmatprep.subr.mxu0 0.0
        %808 = vmatpush1.msra.mxu0 %v486
        %809 = vmatprep.mubr.f32.mxu0 %v358
        %810 = vmatmul.mubr.f32.gmra.mrb[0].mxu0 %v350
        %v811 = vpop.f32.mrb[0].mxu0
        %v812 = vadd.f32 %v707, %v811
        %v813 = vpop.f32.mrb[0].mxu0
        %814 = vmatprep.mubr.f32.mxu0 %v359
        %815 = vmatmul.mubr.f32.gmra.mrb[0].mxu0 %v351
        %v816 = vpop.f32.mrb[0].mxu0
        %v817 = vadd.f32 %v712, %v816
        %v818 = vpop.f32.mrb[0].mxu0
        %819 = vmatprep.mubr.f32.mxu0 %v360
        %820 = vmatmul.mubr.f32.gmra.mrb[0].mxu0 %v352
        %v821 = vpop.f32.mrb[0].mxu0
        %v822 = vadd.f32 %v717, %v821
        %v823 = vpop.f32.mrb[0].mxu0
        %824 = vmatprep.mubr.f32.mxu0 %v361
        %825 = vmatmul.mubr.f32.gmra.mrb[0].mxu0 %v353
        %v826 = vpop.f32.mrb[0].mxu0
        %v827 = vadd.f32 %v722, %v826
        %v828 = vpop.f32.mrb[0].mxu0
        %829 = vmatprep.mubr.f32.mxu0 %v362
        %830 = vmatmul.mubr.f32.gmra.mrb[0].mxu0 %v354
        %v831 = vpop.f32.mrb[0].mxu0
        %v832 = vadd.f32 %v727, %v831
        %v833 = vpop.f32.mrb[0].mxu0
        %834 = vmatprep.mubr.f32.mxu0 %v363
        %835 = vmatmul.mubr.f32.gmra.mrb[0].mxu0 %v355
        %v836 = vpop.f32.mrb[0].mxu0
        %v837 = vadd.f32 %v732, %v836
        %v838 = vpop.f32.mrb[0].mxu0
        %839 = vmatprep.mubr.f32.mxu0 %v364
        %840 = vmatmul.mubr.f32.gmra.mrb[0].mxu0 %v356
        %v841 = vpop.f32.mrb[0].mxu0
        %v842 = vadd.f32 %v737, %v841
        %v843 = vpop.f32.mrb[0].mxu0
        %844 = vmatprep.mubr.f32.mxu0 %v365
        %845 = vmatmul.mubr.f32.gmra.mrb[0].mxu0 %v357
        %v846 = vpop.f32.mrb[0].mxu0
        %v847 = vadd.f32 %v742, %v846
        %v848 = vpop.f32.mrb[0].mxu0
        %849 = vdwg.mxu0
        %850 = vmatprep.subr.mxu0 0.0
        %851 = vmatpush1.msra.mxu0 %v487
        %852 = vmatprep.subr.mxu0 0.0
        %853 = vmatpush1.msra.mxu0 %v488
        %854 = vmatprep.subr.mxu0 0.0
        %855 = vmatpush1.msra.mxu0 %v489
        %856 = vmatprep.subr.mxu0 0.0
        %857 = vmatpush1.msra.mxu0 %v490
        %858 = vmatprep.subr.mxu0 0.0
        %859 = vmatpush1.msra.mxu0 %v491
        %860 = vmatprep.subr.mxu0 0.0
        %861 = vmatpush1.msra.mxu0 %v492
        %862 = vmatprep.subr.mxu0 0.0
        %863 = vmatpush1.msra.mxu0 %v493
        %864 = vmatprep.subr.mxu0 0.0
        %865 = vmatpush1.msra.mxu0 %v494
        %866 = vmatprep.subr.mxu0 0.0
        %867 = vmatpush1.msra.mxu0 %v495
        %868 = vmatprep.subr.mxu0 0.0
        %869 = vmatpush1.msra.mxu0 %v496
        %870 = vmatprep.subr.mxu0 0.0
        %871 = vmatpush1.msra.mxu0 %v497
        %872 = vmatprep.subr.mxu0 0.0
        %873 = vmatpush1.msra.mxu0 %v498
        %874 = vmatprep.subr.mxu0 0.0
        %875 = vmatpush1.msra.mxu0 %v499
        %876 = vmatprep.subr.mxu0 0.0
        %877 = vmatpush1.msra.mxu0 %v500
        %878 = vmatprep.subr.mxu0 0.0
        %879 = vmatpush1.msra.mxu0 %v501
        %880 = vmatprep.subr.mxu0 0.0
        %881 = vmatpush1.msra.mxu0 %v502
        %882 = vmatprep.subr.mxu0 0.0
        %883 = vmatpush1.msra.mxu0 %v503
        %884 = vmatprep.subr.mxu0 0.0
        %885 = vmatpush1.msra.mxu0 %v504
        %886 = vmatprep.subr.mxu0 0.0
        %887 = vmatpush1.msra.mxu0 %v505
        %888 = vmatprep.subr.mxu0 0.0
        %889 = vmatpush1.msra.mxu0 %v506
        %890 = vmatprep.subr.mxu0 0.0
        %891 = vmatpush1.msra.mxu0 %v507
        %892 = vmatprep.subr.mxu0 0.0
        %893 = vmatpush1.msra.mxu0 %v508
        %894 = vmatprep.subr.mxu0 0.0
        %895 = vmatpush1.msra.mxu0 %v509
        %896 = vmatprep.subr.mxu0 0.0
        %897 = vmatpush1.msra.mxu0 %v510
        %898 = vmatprep.subr.mxu0 0.0
        %899 = vmatpush1.msra.mxu0 %v511
        %900 = vmatprep.subr.mxu0 0.0
        %901 = vmatpush1.msra.mxu0 %v512
        %902 = vmatprep.subr.mxu0 0.0
        %903 = vmatpush1.msra.mxu0 %v513
        %904 = vmatprep.subr.mxu0 0.0
        %905 = vmatpush1.msra.mxu0 %v514
        %906 = vmatprep.subr.mxu0 0.0
        %907 = vmatpush1.msra.mxu0 %v515
        %908 = vmatprep.subr.mxu0 0.0
        %909 = vmatpush1.msra.mxu0 %v516
        %910 = vmatprep.subr.mxu0 0.0
        %911 = vmatpush1.msra.mxu0 %v517
        %912 = vmatprep.subr.mxu0 0.0
        %913 = vmatpush1.msra.mxu0 %v518
        %914 = vmatprep.mubr.f32.mxu0 %v375
        %915 = vmatmul.mubr.f32.gmra.mrb[0].mxu0 %v367
        %v916 = vpop.f32.mrb[0].mxu0
        %v917 = vadd.f32 %v812, %v916
        %v918 = vpop.f32.mrb[0].mxu0
        %919 = vmatprep.mubr.f32.mxu0 %v376
        %920 = vmatmul.mubr.f32.gmra.mrb[0].mxu0 %v368
        %v921 = vpop.f32.mrb[0].mxu0
        %v922 = vadd.f32 %v817, %v921
        %v923 = vpop.f32.mrb[0].mxu0
        %924 = vmatprep.mubr.f32.mxu0 %v377
        %925 = vmatmul.mubr.f32.gmra.mrb[0].mxu0 %v369
        %v926 = vpop.f32.mrb[0].mxu0
        %v927 = vadd.f32 %v822, %v926
        %v928 = vpop.f32.mrb[0].mxu0
        %929 = vmatprep.mubr.f32.mxu0 %v378
        %930 = vmatmul.mubr.f32.gmra.mrb[0].mxu0 %v370
        %v931 = vpop.f32.mrb[0].mxu0
        %v932 = vadd.f32 %v827, %v931
        %v933 = vpop.f32.mrb[0].mxu0
        %934 = vmatprep.mubr.f32.mxu0 %v379
        %935 = vmatmul.mubr.f32.gmra.mrb[0].mxu0 %v371
        %v936 = vpop.f32.mrb[0].mxu0
        %v937 = vadd.f32 %v832, %v936
        %v938 = vpop.f32.mrb[0].mxu0
        %939 = vmatprep.mubr.f32.mxu0 %v380
        %940 = vmatmul.mubr.f32.gmra.mrb[0].mxu0 %v372
        %v941 = vpop.f32.mrb[0].mxu0
        %v942 = vadd.f32 %v837, %v941
        %v943 = vpop.f32.mrb[0].mxu0
        %944 = vmatprep.mubr.f32.mxu0 %v381
        %945 = vmatmul.mubr.f32.gmra.mrb[0].mxu0 %v373
        %v946 = vpop.f32.mrb[0].mxu0
        %v947 = vadd.f32 %v842, %v946
        %v948 = vpop.f32.mrb[0].mxu0
        %949 = vmatprep.mubr.f32.mxu0 %v382
        %950 = vmatmul.mubr.f32.gmra.mrb[0].mxu0 %v374
        %v951 = vpop.f32.mrb[0].mxu0
        %v952 = vadd.f32 %v847, %v951
        %v953 = vpop.f32.mrb[0].mxu0
        %954 = vdwg.mxu0
        %955 = vmatprep.subr.mxu0 0.0
        %956 = vmatpush1.msra.mxu0 %v519
        %957 = vmatprep.subr.mxu0 0.0
        %958 = vmatpush1.msra.mxu0 %v520
        %959 = vmatprep.subr.mxu0 0.0
        %960 = vmatpush1.msra.mxu0 %v521
        %961 = vmatprep.subr.mxu0 0.0
        %962 = vmatpush1.msra.mxu0 %v522
        %963 = vmatprep.subr.mxu0 0.0
        %964 = vmatpush1.msra.mxu0 %v523
        %965 = vmatprep.subr.mxu0 0.0
        %966 = vmatpush1.msra.mxu0 %v524
        %967 = vmatprep.subr.mxu0 0.0
        %968 = vmatpush1.msra.mxu0 %v525
        %969 = vmatprep.subr.mxu0 0.0
        %970 = vmatpush1.msra.mxu0 %v526
        %971 = vmatprep.subr.mxu0 0.0
        %972 = vmatpush1.msra.mxu0 %v527
        %973 = vmatprep.subr.mxu0 0.0
        %974 = vmatpush1.msra.mxu0 %v528
        %975 = vmatprep.subr.mxu0 0.0
        %976 = vmatpush1.msra.mxu0 %v529
        %977 = vmatprep.subr.mxu0 0.0
        %978 = vmatpush1.msra.mxu0 %v530
        %979 = vmatprep.subr.mxu0 0.0
        %980 = vmatpush1.msra.mxu0 %v531
        %981 = vmatprep.subr.mxu0 0.0
        %982 = vmatpush1.msra.mxu0 %v532
        %983 = vmatprep.subr.mxu0 0.0
        %984 = vmatpush1.msra.mxu0 %v533
        %985 = vmatprep.subr.mxu0 0.0
        %986 = vmatpush1.msra.mxu0 %v534
        %987 = vmatprep.subr.mxu0 0.0
        %988 = vmatpush1.msra.mxu0 0.0
        %989 = vmatprep.subr.mxu0 0.0
        %990 = vmatpush1.msra.mxu0 0.0
        %991 = vmatprep.subr.mxu0 0.0
        %992 = vmatpush1.msra.mxu0 0.0
        %993 = vmatprep.subr.mxu0 0.0
        %994 = vmatpush1.msra.mxu0 0.0
        %995 = vmatprep.subr.mxu0 0.0
        %996 = vmatpush1.msra.mxu0 0.0
        %997 = vmatprep.subr.mxu0 0.0
        %998 = vmatpush1.msra.mxu0 0.0
        %999 = vmatprep.subr.mxu0 0.0
        %1000 = vmatpush1.msra.mxu0 0.0
        %1001 = vmatprep.subr.mxu0 0.0
        %1002 = vmatpush1.msra.mxu0 0.0
        %1003 = vmatprep.subr.mxu0 0.0
        %1004 = vmatpush1.msra.mxu0 0.0
        %1005 = vmatprep.subr.mxu0 0.0
        %1006 = vmatpush1.msra.mxu0 0.0
        %1007 = vmatprep.subr.mxu0 0.0
        %1008 = vmatpush1.msra.mxu0 0.0
        %1009 = vmatprep.subr.mxu0 0.0
        %1010 = vmatpush1.msra.mxu0 0.0
        %1011 = vmatprep.subr.mxu0 0.0
        %1012 = vmatpush1.msra.mxu0 0.0
        %1013 = vmatprep.subr.mxu0 0.0
        %1014 = vmatpush1.msra.mxu0 0.0
        %1015 = vmatprep.subr.mxu0 0.0
        %1016 = vmatpush1.msra.mxu0 0.0
        %1017 = vmatprep.subr.mxu0 0.0
        %1018 = vmatpush1.msra.mxu0 0.0
        %1019 = vmatprep.mubr.f32.mxu0 0.0
        %1020 = vmatmul.mubr.f32.gmra.mrb[0].mxu0 %v383
        %v1021 = vpop.f32.mrb[0].mxu0
        %v1022 = vadd.f32 %v917, %v1021
        %v1023 = vpop.f32.mrb[0].mxu0
        %1024 = vmatprep.mubr.f32.mxu0 0.0
        %1025 = vmatmul.mubr.f32.gmra.mrb[0].mxu0 %v384
        %v1026 = vpop.f32.mrb[0].mxu0
        %v1027 = vadd.f32 %v922, %v1026
        %v1028 = vpop.f32.mrb[0].mxu0
        %1029 = vmatprep.mubr.f32.mxu0 0.0
        %1030 = vmatmul.mubr.f32.gmra.mrb[0].mxu0 %v385
        %v1031 = vpop.f32.mrb[0].mxu0
        %v1032 = vadd.f32 %v927, %v1031
        %v1033 = vpop.f32.mrb[0].mxu0
        %1034 = vmatprep.mubr.f32.mxu0 0.0
        %1035 = vmatmul.mubr.f32.gmra.mrb[0].mxu0 %v386
        %v1036 = vpop.f32.mrb[0].mxu0
        %v1037 = vadd.f32 %v932, %v1036
        %v1038 = vpop.f32.mrb[0].mxu0
        %1039 = vmatprep.mubr.f32.mxu0 0.0
        %1040 = vmatmul.mubr.f32.gmra.mrb[0].mxu0 %v387
        %v1041 = vpop.f32.mrb[0].mxu0
        %v1042 = vadd.f32 %v937, %v1041
        %v1043 = vpop.f32.mrb[0].mxu0
        %1044 = vmatprep.mubr.f32.mxu0 0.0
        %1045 = vmatmul.mubr.f32.gmra.mrb[0].mxu0 %v388
        %v1046 = vpop.f32.mrb[0].mxu0
        %v1047 = vadd.f32 %v942, %v1046
        %v1048 = vpop.f32.mrb[0].mxu0
        %1049 = vmatprep.mubr.f32.mxu0 0.0
        %1050 = vmatmul.mubr.f32.gmra.mrb[0].mxu0 %v389
        %v1051 = vpop.f32.mrb[0].mxu0
        %v1052 = vadd.f32 %v947, %v1051
        %v1053 = vpop.f32.mrb[0].mxu0
        %1054 = vmatprep.mubr.f32.mxu0 0.0
        %1055 = vmatmul.mubr.f32.gmra.mrb[0].mxu0 %v390
        %v1056 = vpop.f32.mrb[0].mxu0
        %v1057 = vadd.f32 %v952, %v1056
        %v1058 = vpop.f32.mrb[0].mxu0
        %1059 = vdwg.mxu0
        %v1060 = vlaneseq
        %v1061 = vshrl.u32 %v1060, 7
        %v1062 = vsub.s32 0, %v1061
        %v1063 = vrot.slane %v255, %v1062
        %v1064 = vmul.f32 %v1022, %v1063
        %v1065 = vmul.f32 %v1027, %v1063
        %v1066 = vmul.f32 %v1032, %v1063
        %v1067 = vmul.f32 %v1037, %v1063
        %v1068 = vmul.f32 %v1042, %v1063
        %v1069 = vmul.f32 %v1047, %v1063
        %v1070 = vmul.f32 %v1052, %v1063
        %v1071 = vmul.f32 %v1057, %v1063
        %v1072 = vlaneseq
        %v1073 = vshrl.u32 %v1072, 7
        %v1074 = vsub.s32 0, %v1073
        %v1075 = vrot.slane %v256, %v1074
        %v1076 = vadd.f32 %v1064, %v1075
        %v1077 = vadd.f32 %v1065, %v1075
        %v1078 = vadd.f32 %v1066, %v1075
        %v1079 = vadd.f32 %v1067, %v1075
        %v1080 = vadd.f32 %v1068, %v1075
        %v1081 = vadd.f32 %v1069, %v1075
        %v1082 = vadd.f32 %v1070, %v1075
        %v1083 = vadd.f32 %v1071, %v1075
        %v1084 = vmax.f32 %v1076, 0.0
        %v1085 = vmax.f32 %v1077, 0.0
        %v1086 = vmax.f32 %v1078, 0.0
        %v1087 = vmax.f32 %v1079, 0.0
        %v1088 = vmax.f32 %v1080, 0.0
        %v1089 = vmax.f32 %v1081, 0.0
        %v1090 = vmax.f32 %v1082, 0.0
        %v1091 = vmax.f32 %v1083, 0.0
        %1092 = vst [vmem:[%s309 + $0x1] sm:$0xff] %v1084
        %1093 = vst [vmem:[%s309 + $0x11] sm:$0xff] %v1085
        %1094 = vst [vmem:[%s309 + $0x21] sm:$0xff] %v1086
        %1095 = vst [vmem:[%s309 + $0x31] sm:$0xff] %v1087
        %1096 = vst [vmem:[%s309 + $0x41] sm:$0xff] %v1088
        %1097 = vst [vmem:[%s309 + $0x51] sm:$0xff] %v1089
        %1098 = vst [vmem:[%s309 + $0x61] sm:$0xff] %v1090
        %1099 = vst [vmem:[%s309 + $0x71] sm:$0xff] %v1091
        %v1100 = vld [vmem:[#allocation2] sm:$0xff]
        %v1101 = vld [vmem:[#allocation2 + $0x10] sm:$0xff]
        %v1102 = vld [vmem:[#allocation2 + $0x20] sm:$0xff]
        %v1103 = vld [vmem:[#allocation2 + $0x30] sm:$0xff]
        %v1104 = vld [vmem:[#allocation2 + $0x40] sm:$0xff]
        %v1105 = vld [vmem:[#allocation2 + $0x50] sm:$0xff]
        %v1106 = vld [vmem:[#allocation2 + $0x60] sm:$0xff]
        %v1107 = vld [vmem:[#allocation2 + $0x70] sm:$0xff]
        %v1108 = vld [vmem:[#allocation2 + $0x1] sm:$0xff]
        %v1109 = vld [vmem:[#allocation2 + $0x11] sm:$0xff]
        %v1110 = vld [vmem:[#allocation2 + $0x21] sm:$0xff]
        %v1111 = vld [vmem:[#allocation2 + $0x31] sm:$0xff]
        %v1112 = vld [vmem:[#allocation2 + $0x41] sm:$0xff]
        %v1113 = vld [vmem:[#allocation2 + $0x51] sm:$0xff]
        %v1114 = vld [vmem:[#allocation2 + $0x61] sm:$0xff]
        %v1115 = vld [vmem:[#allocation2 + $0x71] sm:$0xff]
        %v1116 = vld [vmem:[#allocation2 + $0x2] sm:$0xff]
        %v1117 = vld [vmem:[#allocation2 + $0x12] sm:$0xff]
        %v1118 = vld [vmem:[#allocation2 + $0x22] sm:$0xff]
        %v1119 = vld [vmem:[#allocation2 + $0x32] sm:$0xff]
        %v1120 = vld [vmem:[#allocation2 + $0x42] sm:$0xff]
        %v1121 = vld [vmem:[#allocation2 + $0x52] sm:$0xff]
        %v1122 = vld [vmem:[#allocation2 + $0x62] sm:$0xff]
        %v1123 = vld [vmem:[#allocation2 + $0x72] sm:$0xff]
        %v1124 = vld [vmem:[%s309] sm:$0xff]
        %v1125 = vld [vmem:[%s309 + $0x10] sm:$0xff]
        %v1126 = vld [vmem:[%s309 + $0x20] sm:$0xff]
        %v1127 = vld [vmem:[%s309 + $0x30] sm:$0xff]
        %v1128 = vld [vmem:[%s309 + $0x40] sm:$0xff]
        %v1129 = vld [vmem:[%s309 + $0x50] sm:$0xff]
        %v1130 = vld [vmem:[%s309 + $0x60] sm:$0xff]
        %v1131 = vld [vmem:[%s309 + $0x70] sm:$0xff]
        %v1132 = vld [vmem:[%s309 + $0x1] sm:$0xff]
        %v1133 = vld [vmem:[%s309 + $0x11] sm:$0xff]
        %v1134 = vld [vmem:[%s309 + $0x21] sm:$0xff]
        %v1135 = vld [vmem:[%s309 + $0x31] sm:$0xff]
        %v1136 = vld [vmem:[%s309 + $0x41] sm:$0xff]
        %v1137 = vld [vmem:[%s309 + $0x51] sm:$0xff]
        %v1138 = vld [vmem:[%s309 + $0x61] sm:$0xff]
        %v1139 = vld [vmem:[%s309 + $0x71] sm:$0xff]
        %v1140 = vld [vmem:[%s309 + $0x2] sm:$0xff]
        %v1141 = vld [vmem:[%s309 + $0x12] sm:$0xff]
        %v1142 = vld [vmem:[%s309 + $0x22] sm:$0xff]
        %v1143 = vld [vmem:[%s309 + $0x32] sm:$0xff]
        %v1144 = vld [vmem:[%s309 + $0x42] sm:$0xff]
        %v1145 = vld [vmem:[%s309 + $0x52] sm:$0xff]
        %v1146 = vld [vmem:[%s309 + $0x62] sm:$0xff]
        %v1147 = vld [vmem:[%s309 + $0x72] sm:$0xff]
        %v1148 = vld [vmem:[%s366] sm:$0xff]
        %v1149 = vld [vmem:[%s366 + $0x10] sm:$0xff]
        %v1150 = vld [vmem:[%s366 + $0x20] sm:$0xff]
        %v1151 = vld [vmem:[%s366 + $0x30] sm:$0xff]
        %v1152 = vld [vmem:[%s366 + $0x40] sm:$0xff]
        %v1153 = vld [vmem:[%s366 + $0x50] sm:$0xff]
        %v1154 = vld [vmem:[%s366 + $0x60] sm:$0xff]
        %v1155 = vld [vmem:[%s366 + $0x70] sm:$0xff]
        %v1156 = vld [vmem:[%s366 + $0x1] sm:$0xff]
        %v1157 = vld [vmem:[%s366 + $0x11] sm:$0xff]
        %v1158 = vld [vmem:[%s366 + $0x21] sm:$0xff]
        %v1159 = vld [vmem:[%s366 + $0x31] sm:$0xff]
        %v1160 = vld [vmem:[%s366 + $0x41] sm:$0xff]
        %v1161 = vld [vmem:[%s366 + $0x51] sm:$0xff]
        %v1162 = vld [vmem:[%s366 + $0x61] sm:$0xff]
        %v1163 = vld [vmem:[%s366 + $0x71] sm:$0xff]
        %v1164 = vld [vmem:[%s366 + $0x2] sm:$0xff]
        %v1165 = vld [vmem:[%s366 + $0x12] sm:$0xff]
        %v1166 = vld [vmem:[%s366 + $0x22] sm:$0xff]
        %v1167 = vld [vmem:[%s366 + $0x32] sm:$0xff]
        %v1168 = vld [vmem:[%s366 + $0x42] sm:$0xff]
        %v1169 = vld [vmem:[%s366 + $0x52] sm:$0xff]
        %v1170 = vld [vmem:[%s366 + $0x62] sm:$0xff]
        %v1171 = vld [vmem:[%s366 + $0x72] sm:$0xff]
        %v1172 = vld [vmem:[#allocation8] sm:$0xff]
        %v1173 = vld [vmem:[#allocation8 + $0x8] sm:$0xff]
        %v1174 = vld [vmem:[#allocation8 + $0x10] sm:$0xff]
        %v1175 = vld [vmem:[#allocation8 + $0x18] sm:$0xff]
        %v1176 = vld [vmem:[#allocation8 + $0x20] sm:$0xff]
        %v1177 = vld [vmem:[#allocation8 + $0x28] sm:$0xff]
        %v1178 = vld [vmem:[#allocation8 + $0x30] sm:$0xff]
        %v1179 = vld [vmem:[#allocation8 + $0x38] sm:$0xff]
        %v1180 = vld [vmem:[#allocation8 + $0x40] sm:$0xff]
        %v1181 = vld [vmem:[#allocation8 + $0x48] sm:$0xff]
        %v1182 = vld [vmem:[#allocation8 + $0x50] sm:$0xff]
        %v1183 = vld [vmem:[#allocation8 + $0x58] sm:$0xff]
        %v1184 = vld [vmem:[#allocation8 + $0x60] sm:$0xff]
        %v1185 = vld [vmem:[#allocation8 + $0x68] sm:$0xff]
        %v1186 = vld [vmem:[#allocation8 + $0x70] sm:$0xff]
        %v1187 = vld [vmem:[#allocation8 + $0x78] sm:$0xff]
        %v1188 = vld [vmem:[#allocation8 + $0x80] sm:$0xff]
        %v1189 = vld [vmem:[#allocation8 + $0x88] sm:$0xff]
        %v1190 = vld [vmem:[#allocation8 + $0x90] sm:$0xff]
        %v1191 = vld [vmem:[#allocation8 + $0x98] sm:$0xff]
        %v1192 = vld [vmem:[#allocation8 + $0xa0] sm:$0xff]
        %v1193 = vld [vmem:[#allocation8 + $0xa8] sm:$0xff]
        %v1194 = vld [vmem:[#allocation8 + $0xb0] sm:$0xff]
        %v1195 = vld [vmem:[#allocation8 + $0xb8] sm:$0xff]
        %v1196 = vld [vmem:[#allocation8 + $0xc0] sm:$0xff]
        %v1197 = vld [vmem:[#allocation8 + $0xc8] sm:$0xff]
        %v1198 = vld [vmem:[#allocation8 + $0xd0] sm:$0xff]
        %v1199 = vld [vmem:[#allocation8 + $0xd8] sm:$0xff]
        %v1200 = vld [vmem:[#allocation8 + $0xe0] sm:$0xff]
        %v1201 = vld [vmem:[#allocation8 + $0xe8] sm:$0xff]
        %v1202 = vld [vmem:[#allocation8 + $0xf0] sm:$0xff]
        %v1203 = vld [vmem:[#allocation8 + $0xf8] sm:$0xff]
        %v1204 = vld [vmem:[#allocation8 + $0x100] sm:$0xff]
        %v1205 = vld [vmem:[#allocation8 + $0x108] sm:$0xff]
        %v1206 = vld [vmem:[#allocation8 + $0x110] sm:$0xff]
        %v1207 = vld [vmem:[#allocation8 + $0x118] sm:$0xff]
        %v1208 = vld [vmem:[#allocation8 + $0x120] sm:$0xff]
        %v1209 = vld [vmem:[#allocation8 + $0x128] sm:$0xff]
        %v1210 = vld [vmem:[#allocation8 + $0x130] sm:$0xff]
        %v1211 = vld [vmem:[#allocation8 + $0x138] sm:$0xff]
        %v1212 = vld [vmem:[#allocation8 + $0x140] sm:$0xff]
        %v1213 = vld [vmem:[#allocation8 + $0x148] sm:$0xff]
        %v1214 = vld [vmem:[#allocation8 + $0x150] sm:$0xff]
        %v1215 = vld [vmem:[#allocation8 + $0x158] sm:$0xff]
        %v1216 = vld [vmem:[#allocation8 + $0x160] sm:$0xff]
        %v1217 = vld [vmem:[#allocation8 + $0x168] sm:$0xff]
        %v1218 = vld [vmem:[#allocation8 + $0x170] sm:$0xff]
        %v1219 = vld [vmem:[#allocation8 + $0x178] sm:$0xff]
        %v1220 = vld [vmem:[#allocation8 + $0x180] sm:$0xff]
        %v1221 = vld [vmem:[#allocation8 + $0x188] sm:$0xff]
        %v1222 = vld [vmem:[#allocation8 + $0x190] sm:$0xff]
        %v1223 = vld [vmem:[#allocation8 + $0x198] sm:$0xff]
        %v1224 = vld [vmem:[#allocation8 + $0x1a0] sm:$0xff]
        %v1225 = vld [vmem:[#allocation8 + $0x1a8] sm:$0xff]
        %v1226 = vld [vmem:[#allocation8 + $0x1b0] sm:$0xff]
        %v1227 = vld [vmem:[#allocation8 + $0x1b8] sm:$0xff]
        %v1228 = vld [vmem:[#allocation8 + $0x1c0] sm:$0xff]
        %v1229 = vld [vmem:[#allocation8 + $0x1c8] sm:$0xff]
        %v1230 = vld [vmem:[#allocation8 + $0x1d0] sm:$0xff]
        %v1231 = vld [vmem:[#allocation8 + $0x1d8] sm:$0xff]
        %v1232 = vld [vmem:[#allocation8 + $0x1e0] sm:$0xff]
        %v1233 = vld [vmem:[#allocation8 + $0x1e8] sm:$0xff]
        %v1234 = vld [vmem:[#allocation8 + $0x1f0] sm:$0xff]
        %v1235 = vld [vmem:[#allocation8 + $0x1f8] sm:$0xff]
        %v1236 = vld [vmem:[#allocation8 + $0x200] sm:$0xff]
        %v1237 = vld [vmem:[#allocation8 + $0x208] sm:$0xff]
        %v1238 = vld [vmem:[#allocation8 + $0x210] sm:$0xff]
        %v1239 = vld [vmem:[#allocation8 + $0x218] sm:$0xff]
        %v1240 = vld [vmem:[#allocation8 + $0x220] sm:$0xff]
        %v1241 = vld [vmem:[#allocation8 + $0x228] sm:$0xff]
        %v1242 = vld [vmem:[#allocation8 + $0x230] sm:$0xff]
        %v1243 = vld [vmem:[#allocation8 + $0x238] sm:$0xff]
        %v1244 = vld [vmem:[#allocation8 + $0x240] sm:$0xff]
        %v1245 = vld [vmem:[#allocation8 + $0x248] sm:$0xff]
        %v1246 = vld [vmem:[#allocation8 + $0x250] sm:$0xff]
        %v1247 = vld [vmem:[#allocation8 + $0x258] sm:$0xff]
        %v1248 = vld [vmem:[#allocation8 + $0x260] sm:$0xff]
        %v1249 = vld [vmem:[#allocation8 + $0x268] sm:$0xff]
        %v1250 = vld [vmem:[#allocation8 + $0x270] sm:$0xff]
        %v1251 = vld [vmem:[#allocation8 + $0x278] sm:$0xff]
        %v1252 = vld [vmem:[#allocation8 + $0x280] sm:$0xff]
        %v1253 = vld [vmem:[#allocation8 + $0x288] sm:$0xff]
        %v1254 = vld [vmem:[#allocation8 + $0x290] sm:$0xff]
        %v1255 = vld [vmem:[#allocation8 + $0x298] sm:$0xff]
        %v1256 = vld [vmem:[#allocation8 + $0x2a0] sm:$0xff]
        %v1257 = vld [vmem:[#allocation8 + $0x2a8] sm:$0xff]
        %v1258 = vld [vmem:[#allocation8 + $0x2b0] sm:$0xff]
        %v1259 = vld [vmem:[#allocation8 + $0x2b8] sm:$0xff]
        %v1260 = vld [vmem:[#allocation8 + $0x2c0] sm:$0xff]
        %v1261 = vld [vmem:[#allocation8 + $0x2c8] sm:$0xff]
        %v1262 = vld [vmem:[#allocation8 + $0x2d0] sm:$0xff]
        %v1263 = vld [vmem:[#allocation8 + $0x2d8] sm:$0xff]
        %v1264 = vld [vmem:[#allocation8 + $0x2e0] sm:$0xff]
        %v1265 = vld [vmem:[#allocation8 + $0x2e8] sm:$0xff]
        %v1266 = vld [vmem:[#allocation8 + $0x2f0] sm:$0xff]
        %v1267 = vld [vmem:[#allocation8 + $0x2f8] sm:$0xff]
        %v1268 = vld [vmem:[#allocation8 + $0x300] sm:$0xff]
        %v1269 = vld [vmem:[#allocation8 + $0x308] sm:$0xff]
        %v1270 = vld [vmem:[#allocation8 + $0x310] sm:$0xff]
        %v1271 = vld [vmem:[#allocation8 + $0x318] sm:$0xff]
        %v1272 = vld [vmem:[#allocation8 + $0x320] sm:$0xff]
        %v1273 = vld [vmem:[#allocation8 + $0x328] sm:$0xff]
        %v1274 = vld [vmem:[#allocation8 + $0x330] sm:$0xff]
        %v1275 = vld [vmem:[#allocation8 + $0x338] sm:$0xff]
        %v1276 = vld [vmem:[#allocation8 + $0x340] sm:$0xff]
        %v1277 = vld [vmem:[#allocation8 + $0x348] sm:$0xff]
        %v1278 = vld [vmem:[#allocation8 + $0x350] sm:$0xff]
        %v1279 = vld [vmem:[#allocation8 + $0x358] sm:$0xff]
        %v1280 = vld [vmem:[#allocation8 + $0x360] sm:$0xff]
        %v1281 = vld [vmem:[#allocation8 + $0x368] sm:$0xff]
        %v1282 = vld [vmem:[#allocation8 + $0x370] sm:$0xff]
        %v1283 = vld [vmem:[#allocation8 + $0x378] sm:$0xff]
        %v1284 = vld [vmem:[#allocation8 + $0x380] sm:$0xff]
        %v1285 = vld [vmem:[#allocation8 + $0x388] sm:$0xff]
        %v1286 = vld [vmem:[#allocation8 + $0x390] sm:$0xff]
        %v1287 = vld [vmem:[#allocation8 + $0x398] sm:$0xff]
        %v1288 = vld [vmem:[#allocation8 + $0x3a0] sm:$0xff]
        %v1289 = vld [vmem:[#allocation8 + $0x3a8] sm:$0xff]
        %v1290 = vld [vmem:[#allocation8 + $0x3b0] sm:$0xff]
        %v1291 = vld [vmem:[#allocation8 + $0x3b8] sm:$0xff]
        %v1292 = vld [vmem:[#allocation8 + $0x3c0] sm:$0xff]
        %v1293 = vld [vmem:[#allocation8 + $0x3c8] sm:$0xff]
        %v1294 = vld [vmem:[#allocation8 + $0x3d0] sm:$0xff]
        %v1295 = vld [vmem:[#allocation8 + $0x3d8] sm:$0xff]
        %v1296 = vld [vmem:[#allocation8 + $0x3e0] sm:$0xff]
        %v1297 = vld [vmem:[#allocation8 + $0x3e8] sm:$0xff]
        %v1298 = vld [vmem:[#allocation8 + $0x3f0] sm:$0xff]
        %v1299 = vld [vmem:[#allocation8 + $0x3f8] sm:$0xff]
        %v1300 = vld [vmem:[#allocation8 + $0x400] sm:$0xff]
        %v1301 = vld [vmem:[#allocation8 + $0x408] sm:$0xff]
        %v1302 = vld [vmem:[#allocation8 + $0x410] sm:$0xff]
        %v1303 = vld [vmem:[#allocation8 + $0x418] sm:$0xff]
        %v1304 = vld [vmem:[#allocation8 + $0x420] sm:$0xff]
        %v1305 = vld [vmem:[#allocation8 + $0x428] sm:$0xff]
        %v1306 = vld [vmem:[#allocation8 + $0x430] sm:$0xff]
        %v1307 = vld [vmem:[#allocation8 + $0x438] sm:$0xff]
        %v1308 = vld [vmem:[#allocation8 + $0x440] sm:$0xff]
        %v1309 = vld [vmem:[#allocation8 + $0x448] sm:$0xff]
        %v1310 = vld [vmem:[#allocation8 + $0x450] sm:$0xff]
        %v1311 = vld [vmem:[#allocation8 + $0x458] sm:$0xff]
        %v1312 = vld [vmem:[#allocation8 + $0x460] sm:$0xff]
        %v1313 = vld [vmem:[#allocation8 + $0x468] sm:$0xff]
        %v1314 = vld [vmem:[#allocation8 + $0x470] sm:$0xff]
        %v1315 = vld [vmem:[#allocation8 + $0x478] sm:$0xff]
        %1316 = vmatprep.subr.mxu0 0.0
        %1317 = vmatpush1.msra.mxu0 %v1172
        %1318 = vmatprep.subr.mxu0 0.0
        %1319 = vmatpush1.msra.mxu0 %v1173
        %1320 = vmatprep.subr.mxu0 0.0
        %1321 = vmatpush1.msra.mxu0 %v1174
        %1322 = vmatprep.subr.mxu0 0.0
        %1323 = vmatpush1.msra.mxu0 %v1175
        %1324 = vmatprep.subr.mxu0 0.0
        %1325 = vmatpush1.msra.mxu0 %v1176
        %1326 = vmatprep.subr.mxu0 0.0
        %1327 = vmatpush1.msra.mxu0 %v1177
        %1328 = vmatprep.subr.mxu0 0.0
        %1329 = vmatpush1.msra.mxu0 %v1178
        %1330 = vmatprep.subr.mxu0 0.0
        %1331 = vmatpush1.msra.mxu0 %v1179
        %1332 = vmatprep.subr.mxu0 0.0
        %1333 = vmatpush1.msra.mxu0 %v1180
        %1334 = vmatprep.subr.mxu0 0.0
        %1335 = vmatpush1.msra.mxu0 %v1181
        %1336 = vmatprep.subr.mxu0 0.0
        %1337 = vmatpush1.msra.mxu0 %v1182
        %1338 = vmatprep.subr.mxu0 0.0
        %1339 = vmatpush1.msra.mxu0 %v1183
        %1340 = vmatprep.subr.mxu0 0.0
        %1341 = vmatpush1.msra.mxu0 %v1184
        %1342 = vmatprep.subr.mxu0 0.0
        %1343 = vmatpush1.msra.mxu0 %v1185
        %1344 = vmatprep.subr.mxu0 0.0
        %1345 = vmatpush1.msra.mxu0 %v1186
        %1346 = vmatprep.subr.mxu0 0.0
        %1347 = vmatpush1.msra.mxu0 %v1187
        %1348 = vmatprep.subr.mxu0 0.0
        %1349 = vmatpush1.msra.mxu0 %v1188
        %1350 = vmatprep.subr.mxu0 0.0
        %1351 = vmatpush1.msra.mxu0 %v1189
        %1352 = vmatprep.subr.mxu0 0.0
        %1353 = vmatpush1.msra.mxu0 %v1190
        %1354 = vmatprep.subr.mxu0 0.0
        %1355 = vmatpush1.msra.mxu0 %v1191
        %1356 = vmatprep.subr.mxu0 0.0
        %1357 = vmatpush1.msra.mxu0 %v1192
        %1358 = vmatprep.subr.mxu0 0.0
        %1359 = vmatpush1.msra.mxu0 %v1193
        %1360 = vmatprep.subr.mxu0 0.0
        %1361 = vmatpush1.msra.mxu0 %v1194
        %1362 = vmatprep.subr.mxu0 0.0
        %1363 = vmatpush1.msra.mxu0 %v1195
        %1364 = vmatprep.subr.mxu0 0.0
        %1365 = vmatpush1.msra.mxu0 %v1196
        %1366 = vmatprep.subr.mxu0 0.0
        %1367 = vmatpush1.msra.mxu0 %v1197
        %1368 = vmatprep.subr.mxu0 0.0
        %1369 = vmatpush1.msra.mxu0 %v1198
        %1370 = vmatprep.subr.mxu0 0.0
        %1371 = vmatpush1.msra.mxu0 %v1199
        %1372 = vmatprep.subr.mxu0 0.0
        %1373 = vmatpush1.msra.mxu0 %v1200
        %1374 = vmatprep.subr.mxu0 0.0
        %1375 = vmatpush1.msra.mxu0 %v1201
        %1376 = vmatprep.subr.mxu0 0.0
        %1377 = vmatpush1.msra.mxu0 %v1202
        %1378 = vmatprep.subr.mxu0 0.0
        %1379 = vmatpush1.msra.mxu0 %v1203
        %1380 = vmatprep.mubr.f32.mxu0 %v1108
        %1381 = vmatmul.mubr.f32.gmra.mrb[0].mxu0 %v1100
        %v1382 = vpop.f32.mrb[0].mxu0
        %v1383 = vadd.f32 0.0, %v1382
        %v1384 = vpop.f32.mrb[0].mxu0
        %1385 = vmatprep.mubr.f32.mxu0 %v1109
        %1386 = vmatmul.mubr.f32.gmra.mrb[0].mxu0 %v1101
        %v1387 = vpop.f32.mrb[0].mxu0
        %v1388 = vadd.f32 0.0, %v1387
        %v1389 = vpop.f32.mrb[0].mxu0
        %1390 = vmatprep.mubr.f32.mxu0 %v1110
        %1391 = vmatmul.mubr.f32.gmra.mrb[0].mxu0 %v1102
        %v1392 = vpop.f32.mrb[0].mxu0
        %v1393 = vadd.f32 0.0, %v1392
        %v1394 = vpop.f32.mrb[0].mxu0
        %1395 = vmatprep.mubr.f32.mxu0 %v1111
        %1396 = vmatmul.mubr.f32.gmra.mrb[0].mxu0 %v1103
        %v1397 = vpop.f32.mrb[0].mxu0
        %v1398 = vadd.f32 0.0, %v1397
        %v1399 = vpop.f32.mrb[0].mxu0
        %1400 = vmatprep.mubr.f32.mxu0 %v1112
        %1401 = vmatmul.mubr.f32.gmra.mrb[0].mxu0 %v1104
        %v1402 = vpop.f32.mrb[0].mxu0
        %v1403 = vadd.f32 0.0, %v1402
        %v1404 = vpop.f32.mrb[0].mxu0
        %1405 = vmatprep.mubr.f32.mxu0 %v1113
        %1406 = vmatmul.mubr.f32.gmra.mrb[0].mxu0 %v1105
        %v1407 = vpop.f32.mrb[0].mxu0
        %v1408 = vadd.f32 0.0, %v1407
        %v1409 = vpop.f32.mrb[0].mxu0
        %1410 = vmatprep.mubr.f32.mxu0 %v1114
        %1411 = vmatmul.mubr.f32.gmra.mrb[0].mxu0 %v1106
        %v1412 = vpop.f32.mrb[0].mxu0
        %v1413 = vadd.f32 0.0, %v1412
        %v1414 = vpop.f32.mrb[0].mxu0
        %1415 = vmatprep.mubr.f32.mxu0 %v1115
        %1416 = vmatmul.mubr.f32.gmra.mrb[0].mxu0 %v1107
        %v1417 = vpop.f32.mrb[0].mxu0
        %v1418 = vadd.f32 0.0, %v1417
        %v1419 = vpop.f32.mrb[0].mxu0
        %1420 = vdwg.mxu0
        %1421 = vmatprep.subr.mxu0 0.0
        %1422 = vmatpush1.msra.mxu0 %v1204
        %1423 = vmatprep.subr.mxu0 0.0
        %1424 = vmatpush1.msra.mxu0 %v1205
        %1425 = vmatprep.subr.mxu0 0.0
        %1426 = vmatpush1.msra.mxu0 %v1206
        %1427 = vmatprep.subr.mxu0 0.0
        %1428 = vmatpush1.msra.mxu0 %v1207
        %1429 = vmatprep.subr.mxu0 0.0
        %1430 = vmatpush1.msra.mxu0 %v1208
        %1431 = vmatprep.subr.mxu0 0.0
        %1432 = vmatpush1.msra.mxu0 %v1209
        %1433 = vmatprep.subr.mxu0 0.0
        %1434 = vmatpush1.msra.mxu0 %v1210
        %1435 = vmatprep.subr.mxu0 0.0
        %1436 = vmatpush1.msra.mxu0 %v1211
        %1437 = vmatprep.subr.mxu0 0.0
        %1438 = vmatpush1.msra.mxu0 %v1212
        %1439 = vmatprep.subr.mxu0 0.0
        %1440 = vmatpush1.msra.mxu0 %v1213
        %1441 = vmatprep.subr.mxu0 0.0
        %1442 = vmatpush1.msra.mxu0 %v1214
        %1443 = vmatprep.subr.mxu0 0.0
        %1444 = vmatpush1.msra.mxu0 %v1215
        %1445 = vmatprep.subr.mxu0 0.0
        %1446 = vmatpush1.msra.mxu0 %v1216
        %1447 = vmatprep.subr.mxu0 0.0
        %1448 = vmatpush1.msra.mxu0 %v1217
        %1449 = vmatprep.subr.mxu0 0.0
        %1450 = vmatpush1.msra.mxu0 %v1218
        %1451 = vmatprep.subr.mxu0 0.0
        %1452 = vmatpush1.msra.mxu0 %v1219
        %1453 = vmatprep.subr.mxu0 0.0
        %1454 = vmatpush1.msra.mxu0 %v1220
        %1455 = vmatprep.subr.mxu0 0.0
        %1456 = vmatpush1.msra.mxu0 %v1221
        %1457 = vmatprep.subr.mxu0 0.0
        %1458 = vmatpush1.msra.mxu0 %v1222
        %1459 = vmatprep.subr.mxu0 0.0
        %1460 = vmatpush1.msra.mxu0 %v1223
        %1461 = vmatprep.subr.mxu0 0.0
        %1462 = vmatpush1.msra.mxu0 %v1224
        %1463 = vmatprep.subr.mxu0 0.0
        %1464 = vmatpush1.msra.mxu0 %v1225
        %1465 = vmatprep.subr.mxu0 0.0
        %1466 = vmatpush1.msra.mxu0 %v1226
        %1467 = vmatprep.subr.mxu0 0.0
        %1468 = vmatpush1.msra.mxu0 %v1227
        %1469 = vmatprep.subr.mxu0 0.0
        %1470 = vmatpush1.msra.mxu0 %v1228
        %1471 = vmatprep.subr.mxu0 0.0
        %1472 = vmatpush1.msra.mxu0 %v1229
        %1473 = vmatprep.subr.mxu0 0.0
        %1474 = vmatpush1.msra.mxu0 %v1230
        %1475 = vmatprep.subr.mxu0 0.0
        %1476 = vmatpush1.msra.mxu0 %v1231
        %1477 = vmatprep.subr.mxu0 0.0
        %1478 = vmatpush1.msra.mxu0 %v1232
        %1479 = vmatprep.subr.mxu0 0.0
        %1480 = vmatpush1.msra.mxu0 %v1233
        %1481 = vmatprep.subr.mxu0 0.0
        %1482 = vmatpush1.msra.mxu0 %v1234
        %1483 = vmatprep.subr.mxu0 0.0
        %1484 = vmatpush1.msra.mxu0 %v1235
        %1485 = vmatprep.mubr.f32.mxu0 %v1124
        %1486 = vmatmul.mubr.f32.gmra.mrb[0].mxu0 %v1116
        %v1487 = vpop.f32.mrb[0].mxu0
        %v1488 = vadd.f32 %v1383, %v1487
        %v1489 = vpop.f32.mrb[0].mxu0
        %1490 = vmatprep.mubr.f32.mxu0 %v1125
        %1491 = vmatmul.mubr.f32.gmra.mrb[0].mxu0 %v1117
        %v1492 = vpop.f32.mrb[0].mxu0
        %v1493 = vadd.f32 %v1388, %v1492
        %v1494 = vpop.f32.mrb[0].mxu0
        %1495 = vmatprep.mubr.f32.mxu0 %v1126
        %1496 = vmatmul.mubr.f32.gmra.mrb[0].mxu0 %v1118
        %v1497 = vpop.f32.mrb[0].mxu0
        %v1498 = vadd.f32 %v1393, %v1497
        %v1499 = vpop.f32.mrb[0].mxu0
        %1500 = vmatprep.mubr.f32.mxu0 %v1127
        %1501 = vmatmul.mubr.f32.gmra.mrb[0].mxu0 %v1119
        %v1502 = vpop.f32.mrb[0].mxu0
        %v1503 = vadd.f32 %v1398, %v1502
        %v1504 = vpop.f32.mrb[0].mxu0
        %1505 = vmatprep.mubr.f32.mxu0 %v1128
        %1506 = vmatmul.mubr.f32.gmra.mrb[0].mxu0 %v1120
        %v1507 = vpop.f32.mrb[0].mxu0
        %v1508 = vadd.f32 %v1403, %v1507
        %v1509 = vpop.f32.mrb[0].mxu0
        %1510 = vmatprep.mubr.f32.mxu0 %v1129
        %1511 = vmatmul.mubr.f32.gmra.mrb[0].mxu0 %v1121
        %v1512 = vpop.f32.mrb[0].mxu0
        %v1513 = vadd.f32 %v1408, %v1512
        %v1514 = vpop.f32.mrb[0].mxu0
        %1515 = vmatprep.mubr.f32.mxu0 %v1130
        %1516 = vmatmul.mubr.f32.gmra.mrb[0].mxu0 %v1122
        %v1517 = vpop.f32.mrb[0].mxu0
        %v1518 = vadd.f32 %v1413, %v1517
        %v1519 = vpop.f32.mrb[0].mxu0
        %1520 = vmatprep.mubr.f32.mxu0 %v1131
        %1521 = vmatmul.mubr.f32.gmra.mrb[0].mxu0 %v1123
        %v1522 = vpop.f32.mrb[0].mxu0
        %v1523 = vadd.f32 %v1418, %v1522
        %v1524 = vpop.f32.mrb[0].mxu0
        %1525 = vdwg.mxu0
        %1526 = vmatprep.subr.mxu0 0.0
        %1527 = vmatpush1.msra.mxu0 %v1236
        %1528 = vmatprep.subr.mxu0 0.0
        %1529 = vmatpush1.msra.mxu0 %v1237
        %1530 = vmatprep.subr.mxu0 0.0
        %1531 = vmatpush1.msra.mxu0 %v1238
        %1532 = vmatprep.subr.mxu0 0.0
        %1533 = vmatpush1.msra.mxu0 %v1239
        %1534 = vmatprep.subr.mxu0 0.0
        %1535 = vmatpush1.msra.mxu0 %v1240
        %1536 = vmatprep.subr.mxu0 0.0
        %1537 = vmatpush1.msra.mxu0 %v1241
        %1538 = vmatprep.subr.mxu0 0.0
        %1539 = vmatpush1.msra.mxu0 %v1242
        %1540 = vmatprep.subr.mxu0 0.0
        %1541 = vmatpush1.msra.mxu0 %v1243
        %1542 = vmatprep.subr.mxu0 0.0
        %1543 = vmatpush1.msra.mxu0 %v1244
        %1544 = vmatprep.subr.mxu0 0.0
        %1545 = vmatpush1.msra.mxu0 %v1245
        %1546 = vmatprep.subr.mxu0 0.0
        %1547 = vmatpush1.msra.mxu0 %v1246
        %1548 = vmatprep.subr.mxu0 0.0
        %1549 = vmatpush1.msra.mxu0 %v1247
        %1550 = vmatprep.subr.mxu0 0.0
        %1551 = vmatpush1.msra.mxu0 %v1248
        %1552 = vmatprep.subr.mxu0 0.0
        %1553 = vmatpush1.msra.mxu0 %v1249
        %1554 = vmatprep.subr.mxu0 0.0
        %1555 = vmatpush1.msra.mxu0 %v1250
        %1556 = vmatprep.subr.mxu0 0.0
        %1557 = vmatpush1.msra.mxu0 %v1251
        %1558 = vmatprep.subr.mxu0 0.0
        %1559 = vmatpush1.msra.mxu0 %v1252
        %1560 = vmatprep.subr.mxu0 0.0
        %1561 = vmatpush1.msra.mxu0 %v1253
        %1562 = vmatprep.subr.mxu0 0.0
        %1563 = vmatpush1.msra.mxu0 %v1254
        %1564 = vmatprep.subr.mxu0 0.0
        %1565 = vmatpush1.msra.mxu0 %v1255
        %1566 = vmatprep.subr.mxu0 0.0
        %1567 = vmatpush1.msra.mxu0 %v1256
        %1568 = vmatprep.subr.mxu0 0.0
        %1569 = vmatpush1.msra.mxu0 %v1257
        %1570 = vmatprep.subr.mxu0 0.0
        %1571 = vmatpush1.msra.mxu0 %v1258
        %1572 = vmatprep.subr.mxu0 0.0
        %1573 = vmatpush1.msra.mxu0 %v1259
        %1574 = vmatprep.subr.mxu0 0.0
        %1575 = vmatpush1.msra.mxu0 %v1260
        %1576 = vmatprep.subr.mxu0 0.0
        %1577 = vmatpush1.msra.mxu0 %v1261
        %1578 = vmatprep.subr.mxu0 0.0
        %1579 = vmatpush1.msra.mxu0 %v1262
        %1580 = vmatprep.subr.mxu0 0.0
        %1581 = vmatpush1.msra.mxu0 %v1263
        %1582 = vmatprep.subr.mxu0 0.0
        %1583 = vmatpush1.msra.mxu0 %v1264
        %1584 = vmatprep.subr.mxu0 0.0
        %1585 = vmatpush1.msra.mxu0 %v1265
        %1586 = vmatprep.subr.mxu0 0.0
        %1587 = vmatpush1.msra.mxu0 %v1266
        %1588 = vmatprep.subr.mxu0 0.0
        %1589 = vmatpush1.msra.mxu0 %v1267
        %1590 = vmatprep.mubr.f32.mxu0 %v1140
        %1591 = vmatmul.mubr.f32.gmra.mrb[0].mxu0 %v1132
        %v1592 = vpop.f32.mrb[0].mxu0
        %v1593 = vadd.f32 %v1488, %v1592
        %v1594 = vpop.f32.mrb[0].mxu0
        %1595 = vmatprep.mubr.f32.mxu0 %v1141
        %1596 = vmatmul.mubr.f32.gmra.mrb[0].mxu0 %v1133
        %v1597 = vpop.f32.mrb[0].mxu0
        %v1598 = vadd.f32 %v1493, %v1597
        %v1599 = vpop.f32.mrb[0].mxu0
        %1600 = vmatprep.mubr.f32.mxu0 %v1142
        %1601 = vmatmul.mubr.f32.gmra.mrb[0].mxu0 %v1134
        %v1602 = vpop.f32.mrb[0].mxu0
        %v1603 = vadd.f32 %v1498, %v1602
        %v1604 = vpop.f32.mrb[0].mxu0
        %1605 = vmatprep.mubr.f32.mxu0 %v1143
        %1606 = vmatmul.mubr.f32.gmra.mrb[0].mxu0 %v1135
        %v1607 = vpop.f32.mrb[0].mxu0
        %v1608 = vadd.f32 %v1503, %v1607
        %v1609 = vpop.f32.mrb[0].mxu0
        %1610 = vmatprep.mubr.f32.mxu0 %v1144
        %1611 = vmatmul.mubr.f32.gmra.mrb[0].mxu0 %v1136
        %v1612 = vpop.f32.mrb[0].mxu0
        %v1613 = vadd.f32 %v1508, %v1612
        %v1614 = vpop.f32.mrb[0].mxu0
        %1615 = vmatprep.mubr.f32.mxu0 %v1145
        %1616 = vmatmul.mubr.f32.gmra.mrb[0].mxu0 %v1137
        %v1617 = vpop.f32.mrb[0].mxu0
        %v1618 = vadd.f32 %v1513, %v1617
        %v1619 = vpop.f32.mrb[0].mxu0
        %1620 = vmatprep.mubr.f32.mxu0 %v1146
        %1621 = vmatmul.mubr.f32.gmra.mrb[0].mxu0 %v1138
        %v1622 = vpop.f32.mrb[0].mxu0
        %v1623 = vadd.f32 %v1518, %v1622
        %v1624 = vpop.f32.mrb[0].mxu0
        %1625 = vmatprep.mubr.f32.mxu0 %v1147
        %1626 = vmatmul.mubr.f32.gmra.mrb[0].mxu0 %v1139
        %v1627 = vpop.f32.mrb[0].mxu0
        %v1628 = vadd.f32 %v1523, %v1627
        %v1629 = vpop.f32.mrb[0].mxu0
        %1630 = vdwg.mxu0
        %1631 = vmatprep.subr.mxu0 0.0
        %1632 = vmatpush1.msra.mxu0 %v1268
        %1633 = vmatprep.subr.mxu0 0.0
        %1634 = vmatpush1.msra.mxu0 %v1269
        %1635 = vmatprep.subr.mxu0 0.0
        %1636 = vmatpush1.msra.mxu0 %v1270
        %1637 = vmatprep.subr.mxu0 0.0
        %1638 = vmatpush1.msra.mxu0 %v1271
        %1639 = vmatprep.subr.mxu0 0.0
        %1640 = vmatpush1.msra.mxu0 %v1272
        %1641 = vmatprep.subr.mxu0 0.0
        %1642 = vmatpush1.msra.mxu0 %v1273
        %1643 = vmatprep.subr.mxu0 0.0
        %1644 = vmatpush1.msra.mxu0 %v1274
        %1645 = vmatprep.subr.mxu0 0.0
        %1646 = vmatpush1.msra.mxu0 %v1275
        %1647 = vmatprep.subr.mxu0 0.0
        %1648 = vmatpush1.msra.mxu0 %v1276
        %1649 = vmatprep.subr.mxu0 0.0
        %1650 = vmatpush1.msra.mxu0 %v1277
        %1651 = vmatprep.subr.mxu0 0.0
        %1652 = vmatpush1.msra.mxu0 %v1278
        %1653 = vmatprep.subr.mxu0 0.0
        %1654 = vmatpush1.msra.mxu0 %v1279
        %1655 = vmatprep.subr.mxu0 0.0
        %1656 = vmatpush1.msra.mxu0 %v1280
        %1657 = vmatprep.subr.mxu0 0.0
        %1658 = vmatpush1.msra.mxu0 %v1281
        %1659 = vmatprep.subr.mxu0 0.0
        %1660 = vmatpush1.msra.mxu0 %v1282
        %1661 = vmatprep.subr.mxu0 0.0
        %1662 = vmatpush1.msra.mxu0 %v1283
        %1663 = vmatprep.subr.mxu0 0.0
        %1664 = vmatpush1.msra.mxu0 %v1284
        %1665 = vmatprep.subr.mxu0 0.0
        %1666 = vmatpush1.msra.mxu0 %v1285
        %1667 = vmatprep.subr.mxu0 0.0
        %1668 = vmatpush1.msra.mxu0 %v1286
        %1669 = vmatprep.subr.mxu0 0.0
        %1670 = vmatpush1.msra.mxu0 %v1287
        %1671 = vmatprep.subr.mxu0 0.0
        %1672 = vmatpush1.msra.mxu0 %v1288
        %1673 = vmatprep.subr.mxu0 0.0
        %1674 = vmatpush1.msra.mxu0 %v1289
        %1675 = vmatprep.subr.mxu0 0.0
        %1676 = vmatpush1.msra.mxu0 %v1290
        %1677 = vmatprep.subr.mxu0 0.0
        %1678 = vmatpush1.msra.mxu0 %v1291
        %1679 = vmatprep.subr.mxu0 0.0
        %1680 = vmatpush1.msra.mxu0 %v1292
        %1681 = vmatprep.subr.mxu0 0.0
        %1682 = vmatpush1.msra.mxu0 %v1293
        %1683 = vmatprep.subr.mxu0 0.0
        %1684 = vmatpush1.msra.mxu0 %v1294
        %1685 = vmatprep.subr.mxu0 0.0
        %1686 = vmatpush1.msra.mxu0 %v1295
        %1687 = vmatprep.subr.mxu0 0.0
        %1688 = vmatpush1.msra.mxu0 %v1296
        %1689 = vmatprep.subr.mxu0 0.0
        %1690 = vmatpush1.msra.mxu0 %v1297
        %1691 = vmatprep.subr.mxu0 0.0
        %1692 = vmatpush1.msra.mxu0 %v1298
        %1693 = vmatprep.subr.mxu0 0.0
        %1694 = vmatpush1.msra.mxu0 %v1299
        %1695 = vmatprep.mubr.f32.mxu0 %v1156
        %1696 = vmatmul.mubr.f32.gmra.mrb[0].mxu0 %v1148
        %v1697 = vpop.f32.mrb[0].mxu0
        %v1698 = vadd.f32 %v1593, %v1697
        %v1699 = vpop.f32.mrb[0].mxu0
        %1700 = vmatprep.mubr.f32.mxu0 %v1157
        %1701 = vmatmul.mubr.f32.gmra.mrb[0].mxu0 %v1149
        %v1702 = vpop.f32.mrb[0].mxu0
        %v1703 = vadd.f32 %v1598, %v1702
        %v1704 = vpop.f32.mrb[0].mxu0
        %1705 = vmatprep.mubr.f32.mxu0 %v1158
        %1706 = vmatmul.mubr.f32.gmra.mrb[0].mxu0 %v1150
        %v1707 = vpop.f32.mrb[0].mxu0
        %v1708 = vadd.f32 %v1603, %v1707
        %v1709 = vpop.f32.mrb[0].mxu0
        %1710 = vmatprep.mubr.f32.mxu0 %v1159
        %1711 = vmatmul.mubr.f32.gmra.mrb[0].mxu0 %v1151
        %v1712 = vpop.f32.mrb[0].mxu0
        %v1713 = vadd.f32 %v1608, %v1712
        %v1714 = vpop.f32.mrb[0].mxu0
        %1715 = vmatprep.mubr.f32.mxu0 %v1160
        %1716 = vmatmul.mubr.f32.gmra.mrb[0].mxu0 %v1152
        %v1717 = vpop.f32.mrb[0].mxu0
        %v1718 = vadd.f32 %v1613, %v1717
        %v1719 = vpop.f32.mrb[0].mxu0
        %1720 = vmatprep.mubr.f32.mxu0 %v1161
        %1721 = vmatmul.mubr.f32.gmra.mrb[0].mxu0 %v1153
        %v1722 = vpop.f32.mrb[0].mxu0
        %v1723 = vadd.f32 %v1618, %v1722
        %v1724 = vpop.f32.mrb[0].mxu0
        %1725 = vmatprep.mubr.f32.mxu0 %v1162
        %1726 = vmatmul.mubr.f32.gmra.mrb[0].mxu0 %v1154
        %v1727 = vpop.f32.mrb[0].mxu0
        %v1728 = vadd.f32 %v1623, %v1727
        %v1729 = vpop.f32.mrb[0].mxu0
        %1730 = vmatprep.mubr.f32.mxu0 %v1163
        %1731 = vmatmul.mubr.f32.gmra.mrb[0].mxu0 %v1155
        %v1732 = vpop.f32.mrb[0].mxu0
        %v1733 = vadd.f32 %v1628, %v1732
        %v1734 = vpop.f32.mrb[0].mxu0
        %1735 = vdwg.mxu0
        %1736 = vmatprep.subr.mxu0 0.0
        %1737 = vmatpush1.msra.mxu0 %v1300
        %1738 = vmatprep.subr.mxu0 0.0
        %1739 = vmatpush1.msra.mxu0 %v1301
        %1740 = vmatprep.subr.mxu0 0.0
        %1741 = vmatpush1.msra.mxu0 %v1302
        %1742 = vmatprep.subr.mxu0 0.0
        %1743 = vmatpush1.msra.mxu0 %v1303
        %1744 = vmatprep.subr.mxu0 0.0
        %1745 = vmatpush1.msra.mxu0 %v1304
        %1746 = vmatprep.subr.mxu0 0.0
        %1747 = vmatpush1.msra.mxu0 %v1305
        %1748 = vmatprep.subr.mxu0 0.0
        %1749 = vmatpush1.msra.mxu0 %v1306
        %1750 = vmatprep.subr.mxu0 0.0
        %1751 = vmatpush1.msra.mxu0 %v1307
        %1752 = vmatprep.subr.mxu0 0.0
        %1753 = vmatpush1.msra.mxu0 %v1308
        %1754 = vmatprep.subr.mxu0 0.0
        %1755 = vmatpush1.msra.mxu0 %v1309
        %1756 = vmatprep.subr.mxu0 0.0
        %1757 = vmatpush1.msra.mxu0 %v1310
        %1758 = vmatprep.subr.mxu0 0.0
        %1759 = vmatpush1.msra.mxu0 %v1311
        %1760 = vmatprep.subr.mxu0 0.0
        %1761 = vmatpush1.msra.mxu0 %v1312
        %1762 = vmatprep.subr.mxu0 0.0
        %1763 = vmatpush1.msra.mxu0 %v1313
        %1764 = vmatprep.subr.mxu0 0.0
        %1765 = vmatpush1.msra.mxu0 %v1314
        %1766 = vmatprep.subr.mxu0 0.0
        %1767 = vmatpush1.msra.mxu0 %v1315
        %1768 = vmatprep.subr.mxu0 0.0
        %1769 = vmatpush1.msra.mxu0 0.0
        %1770 = vmatprep.subr.mxu0 0.0
        %1771 = vmatpush1.msra.mxu0 0.0
        %1772 = vmatprep.subr.mxu0 0.0
        %1773 = vmatpush1.msra.mxu0 0.0
        %1774 = vmatprep.subr.mxu0 0.0
        %1775 = vmatpush1.msra.mxu0 0.0
        %1776 = vmatprep.subr.mxu0 0.0
        %1777 = vmatpush1.msra.mxu0 0.0
        %1778 = vmatprep.subr.mxu0 0.0
        %1779 = vmatpush1.msra.mxu0 0.0
        %1780 = vmatprep.subr.mxu0 0.0
        %1781 = vmatpush1.msra.mxu0 0.0
        %1782 = vmatprep.subr.mxu0 0.0
        %1783 = vmatpush1.msra.mxu0 0.0
        %1784 = vmatprep.subr.mxu0 0.0
        %1785 = vmatpush1.msra.mxu0 0.0
        %1786 = vmatprep.subr.mxu0 0.0
        %1787 = vmatpush1.msra.mxu0 0.0
        %1788 = vmatprep.subr.mxu0 0.0
        %1789 = vmatpush1.msra.mxu0 0.0
        %1790 = vmatprep.subr.mxu0 0.0
        %1791 = vmatpush1.msra.mxu0 0.0
        %1792 = vmatprep.subr.mxu0 0.0
        %1793 = vmatpush1.msra.mxu0 0.0
        %1794 = vmatprep.subr.mxu0 0.0
        %1795 = vmatpush1.msra.mxu0 0.0
        %1796 = vmatprep.subr.mxu0 0.0
        %1797 = vmatpush1.msra.mxu0 0.0
        %1798 = vmatprep.subr.mxu0 0.0
        %1799 = vmatpush1.msra.mxu0 0.0
        %1800 = vmatprep.mubr.f32.mxu0 0.0
        %1801 = vmatmul.mubr.f32.gmra.mrb[0].mxu0 %v1164
        %v1802 = vpop.f32.mrb[0].mxu0
        %v1803 = vadd.f32 %v1698, %v1802
        %v1804 = vpop.f32.mrb[0].mxu0
        %1805 = vmatprep.mubr.f32.mxu0 0.0
        %1806 = vmatmul.mubr.f32.gmra.mrb[0].mxu0 %v1165
        %v1807 = vpop.f32.mrb[0].mxu0
        %v1808 = vadd.f32 %v1703, %v1807
        %v1809 = vpop.f32.mrb[0].mxu0
        %1810 = vmatprep.mubr.f32.mxu0 0.0
        %1811 = vmatmul.mubr.f32.gmra.mrb[0].mxu0 %v1166
        %v1812 = vpop.f32.mrb[0].mxu0
        %v1813 = vadd.f32 %v1708, %v1812
        %v1814 = vpop.f32.mrb[0].mxu0
        %1815 = vmatprep.mubr.f32.mxu0 0.0
        %1816 = vmatmul.mubr.f32.gmra.mrb[0].mxu0 %v1167
        %v1817 = vpop.f32.mrb[0].mxu0
        %v1818 = vadd.f32 %v1713, %v1817
        %v1819 = vpop.f32.mrb[0].mxu0
        %1820 = vmatprep.mubr.f32.mxu0 0.0
        %1821 = vmatmul.mubr.f32.gmra.mrb[0].mxu0 %v1168
        %v1822 = vpop.f32.mrb[0].mxu0
        %v1823 = vadd.f32 %v1718, %v1822
        %v1824 = vpop.f32.mrb[0].mxu0
        %1825 = vmatprep.mubr.f32.mxu0 0.0
        %1826 = vmatmul.mubr.f32.gmra.mrb[0].mxu0 %v1169
        %v1827 = vpop.f32.mrb[0].mxu0
        %v1828 = vadd.f32 %v1723, %v1827
        %v1829 = vpop.f32.mrb[0].mxu0
        %1830 = vmatprep.mubr.f32.mxu0 0.0
        %1831 = vmatmul.mubr.f32.gmra.mrb[0].mxu0 %v1170
        %v1832 = vpop.f32.mrb[0].mxu0
        %v1833 = vadd.f32 %v1728, %v1832
        %v1834 = vpop.f32.mrb[0].mxu0
        %1835 = vmatprep.mubr.f32.mxu0 0.0
        %1836 = vmatmul.mubr.f32.gmra.mrb[0].mxu0 %v1171
        %v1837 = vpop.f32.mrb[0].mxu0
        %v1838 = vadd.f32 %v1733, %v1837
        %v1839 = vpop.f32.mrb[0].mxu0
        %1840 = vdwg.mxu0
        %v1841 = vadd.f32 %v1803, %v245
        %v1842 = vadd.f32 %v1808, %v246
        %v1843 = vadd.f32 %v1813, %v247
        %v1844 = vadd.f32 %v1818, %v248
        %v1845 = vadd.f32 %v1823, %v249
        %v1846 = vadd.f32 %v1828, %v250
        %v1847 = vadd.f32 %v1833, %v251
        %v1848 = vadd.f32 %v1838, %v252
        %1849 = vst [vmem:[%s244] sm:$0xff] %v1841
        %1850 = vst [vmem:[%s244 + $0x8] sm:$0xff] %v1842
        %1851 = vst [vmem:[%s244 + $0x10] sm:$0xff] %v1843
        %1852 = vst [vmem:[%s244 + $0x18] sm:$0xff] %v1844
        %1853 = vst [vmem:[%s244 + $0x20] sm:$0xff] %v1845
        %1854 = vst [vmem:[%s244 + $0x28] sm:$0xff] %v1846
        %1855 = vst [vmem:[%s244 + $0x30] sm:$0xff] %v1847
        %1856 = vst [vmem:[%s244 + $0x38] sm:$0xff] %v1848
        %s1857 = sand.u32 %s119, 1
        %s1858 = scalar_lea.sflag [#allocation5], %s1857
        %s1859 = sand.u32 %s119, 1
        %s1860 = smul.addr %s1859, 64
        %s1861 = scalar_lea.vmem [#allocation9], %s1860
        // Predicated region
        $region49: #{basic_block_forward.1} parent=35 // pred_check
          %p1862 = pneg %p129
        $region50: #{basic_block_forward.1} parent=35 // pred_check_branch
          %1864 = sbr.rel (%p1862) target = $region52
        $region51: #{basic_block_forward.1} parent=35 // pred_region
          %s1866 = ssub.s32 1024, 1024
          %1867 = vsyncadd %s1858, %s1866
          %s1868 = smul.addr %s22, 8
          %s1869 = smul.addr %s1868, 128
          %s1870 = scalar_lea.hbm %s4, %s1869
          %s1871 = sshll.u32 %s1861, 4
          %s1872 = int_to_ptr.vmem [resolvable:$true] %s1871
          %1877 = dma.vmem_to_hbm [thread:$0]  %s1872, 1024, %s1870, %s1858, 128, 128, 8
        $region52: #{basic_block_forward.1} parent=35 // pred_fallthru
          _
      $region36: #{basic_block_forward.1} parent=5 // pred_fallthru
        _
      %p1878 = scmp.le.s32.totalorder 2, %s17
      // Predicated region
      $region53: #{basic_block_forward.1} parent=5 // pred_check
        %p1879 = pneg %p1878
      $region54: #{basic_block_forward.1} parent=5 // pred_check_branch
        %1881 = sbr.rel (%p1879) target = $region56
      $region55: #{basic_block_forward.1} parent=5 // pred_region
        %s1882 = ssub.s32 %s17, 2
        // Predicated region
        $region57: #{basic_block_forward.1} parent=55 // pred_check
          %p1883 = pneg %p135
        $region58: #{basic_block_forward.1} parent=55 // pred_check_branch
          %1885 = sbr.rel (%p1883) target = $region60
        $region59: #{basic_block_forward.1} parent=55 // pred_region
          %s1886 = sand.u32 %s120, 1
          %s1887 = scalar_lea.sflag [#allocation5], %s1886
          %s1888 = sand.u32 %s120, 1
          %s1889 = smul.addr %s1888, 64
          %s1890 = scalar_lea.vmem [#allocation9], %s1889
          %1891 = dma.done %s1887, 1024
        $region60: #{basic_block_forward.1} parent=55 // pred_fallthru
          _
      $region56: #{basic_block_forward.1} parent=5 // pred_fallthru
        _
    $region6: #{basic_block_forward.1} parent=1 // loop_footer
      %s21 = sadd.s32 1, %s17
    $region7: #{basic_block_forward.1} parent=1 // loop_footer_branch
      %16 = sbr.rel target = $region3
    $region8: #{basic_block_forward.1} parent=1 // loop_exit
      _
    %1892 = vsyncpa [#allocation4], 1
    %s1893 = scalar_lea.sflag [#allocation4], 1
    %1894 = vsyncpa %s1893, 1
    %1895 = vsyncpa [#allocation7], 1
    %1896 = vsyncpa [#allocation5], 1
    %s1897 = scalar_lea.sflag [#allocation5], 1
    %1898 = vsyncpa %s1897, 1

</llo_original>
